<compile_context>
chip_gen: v7x
topology: tpu7x:2x2x1
jax: 0.10.0
libtpu: 0.0.40
codegen_flags: <defaults>
</compile_context>

<pallas_src>
import math

import jax
import jax.numpy as jnp
from jax.experimental import pallas as pl
from jax.experimental.pallas import tpu as pltpu

# ---- module constants (from the PyTorch spec) ----
NUM_ACTIONS = 6
VOCAB = 10                      # vocab_sizes
OBS_DIM = 12                    # obs_dim (= sequence length in DTQN)
EMBED_SIZE = 16                 # embed_size
D_MODEL = 512
ACTION_DIM = 128                # DTQN default action_embed_dim
OBS_EMBED_DIM = D_MODEL - ACTION_DIM    # 384

LANE = 128                      # hi-band offset inside the fused one-hot
N_ACT_COLS = NUM_ACTIONS + 1    # 6 real actions + 1 sentinel (zero row)
K_EXT = 2 * LANE                # 256: fused contraction dim (obs band | action+pos band)
N_ID_COLS = OBS_DIM + 2         # 12 obs codes + 1 action code + 1 position code


def _tree_sum(parts):
    """Balanced-tree add of independent (disjoint) f32 masks -- exact, no serial dependency."""
    while len(parts) > 1:
        nxt = [parts[i] + parts[i + 1] for i in range(0, len(parts) - 1, 2)]
        if len(parts) % 2:
            nxt.append(parts[-1])
        parts = nxt
    return parts[0]


def _token_embedding_kernel(ids_ref, w_ext_ref, out_ref):
    """Fused DTQN token embedding for one batch tile (fully vectorized over the tile).

    ids_ref  : (R, 14) int32   per-row codes (R = bt*12 rows, one row per (batch, timestep)):
                                 cols 0..11 : 10*p + obs_id[p]          (lo band targets, 0..119)
                                 col  12    : prev-action id, 6 = t==0 sentinel  (hi band 0..6)
                                 col  13    : 7 + position index                 (hi band 7..18)
    w_ext_ref: (256, 512) f32  fused table:
                                 rows   0..119 = [0_128 | W_comb(10p+v)]
                                 rows 128..133 = [act_table | 0_384]   (row 134 = sentinel zeros)
                                 rows 135..146 = [pos[:, :128] | pos[:, 128:] + b_obs]
    out_ref  : (R, 512) f32    [action_emb || obs_emb] + positional encoding
    """
    rows = out_ref.shape[0]
    ids = ids_ref[...]                                              # (R, 14) int32
    col = jax.lax.broadcasted_iota(jnp.int32, (rows, LANE), 1)      # lane index 0..127

    # independent per-code compares (disjoint targets), combined in a tree -> multi-hot bands
    lo = _tree_sum([jnp.where(ids[:, c:c + 1] == col, 1.0, 0.0) for c in range(OBS_DIM)])
    hi = _tree_sum([jnp.where(ids[:, c:c + 1] == col, 1.0, 0.0)
                    for c in (OBS_DIM, OBS_DIM + 1)])
    onehot = jnp.concatenate([lo, hi], axis=-1)                     # (R, 256)

    # single MXU matmul does gather + Linear + bias + positional encoding + concat
    out_ref[...] = jnp.dot(onehot, w_ext_ref[...], preferred_element_type=jnp.float32)


def make_position_encoding() -> jax.Array:
    position = jnp.arange(OBS_DIM, dtype=jnp.float32)[:, None]
    div_term = jnp.exp(
        jnp.arange(0, D_MODEL, 2, dtype=jnp.float32) * (-math.log(10000.0) / D_MODEL)
    )
    pe = jnp.zeros((OBS_DIM, D_MODEL), jnp.float32)
    pe = pe.at[:, 0::2].set(jnp.sin(position * div_term))
    pe = pe.at[:, 1::2].set(jnp.cos(position * div_term))
    return pe


def _pick_bt(B: int) -> int:
    """Even batch tile (so bt*12 rows % 8 == 0) giving >=2 grid steps whenever B allows."""
    if B >= 32:
        return 16
    bt = max(2, B // 2)
    return bt + (bt % 2)


def dtqn_token_embedding(obss, actions, act_table, obs_table, w_obs, b_obs, pos):
    """Fused DTQN front-end: [rolled/zeroed action embedding || obs embedding] + pos encoding."""
    B, S, OBS = obss.shape
    assert S == OBS_DIM and OBS == OBS_DIM
    assert actions.shape == (B, S, 1)

    # ---- wrapper-side layout plumbing (tiny int32 work) ----
    # roll the *ids* by one timestep; sentinel NUM_ACTIONS at t=0 selects the zero row in-kernel
    prev_act = jnp.roll(actions[..., 0].astype(jnp.int32), shift=1, axis=1)
    prev_act = prev_act.at[:, 0].set(NUM_ACTIONS)
    obs_codes = obss.astype(jnp.int32) + (
        VOCAB * jnp.arange(OBS_DIM, dtype=jnp.int32))[None, None, :]           # (B, 12, 12)
    pos_codes = jnp.broadcast_to(
        (N_ACT_COLS + jnp.arange(OBS_DIM, dtype=jnp.int32))[None, :], (B, S))  # (B, 12)
    ids = jnp.concatenate(
        [obs_codes, prev_act[..., None], pos_codes[..., None]], axis=-1
    ).reshape(B * S, N_ID_COLS)                                                 # (B*12, 14)

    # ---- fused weight table W_ext (256, 512) ----
    # W_comb[10*p + v, :] = obs_table[v, :] @ w_obs[16*p:16*(p+1), :]   (Embedding+Linear fold)
    w_r = w_obs.astype(jnp.float32).reshape(OBS_DIM, EMBED_SIZE, OBS_EMBED_DIM)
    w_comb = jnp.einsum("vk,pkd->pvd", obs_table.astype(jnp.float32), w_r,
                        precision="highest").reshape(OBS_DIM * VOCAB, OBS_EMBED_DIM)
    pos = pos.astype(jnp.float32)
    pos_plus = pos.at[:, ACTION_DIM:].add(b_obs.astype(jnp.float32)[None, :])   # fold obs bias
    w_ext = jnp.zeros((K_EXT, D_MODEL), jnp.float32)
    w_ext = w_ext.at[:OBS_DIM * VOCAB, ACTION_DIM:].set(w_comb)
    w_ext = w_ext.at[LANE:LANE + NUM_ACTIONS, :ACTION_DIM].set(act_table.astype(jnp.float32))
    w_ext = w_ext.at[LANE + N_ACT_COLS:LANE + N_ACT_COLS + OBS_DIM, :].set(pos_plus)

    # ---- batch tiling: big even tile, >=2 parallel grid steps, pad B instead of shrinking ----
    bt = _pick_bt(B)
    grid = pl.cdiv(B, bt)
    b_pad = grid * bt
    if b_pad != B:
        ids = jnp.pad(ids, ((0, (b_pad - B) * S), (0, 0)))
    rows = bt * S
    assert rows % 8 == 0

    out = pl.pallas_call(
        _token_embedding_kernel,
        out_shape=jax.ShapeDtypeStruct((b_pad * S, D_MODEL), jnp.float32),
        grid=(grid,),
        in_specs=[
            pl.BlockSpec((rows, N_ID_COLS), lambda g: (g, 0)),
            pl.BlockSpec((K_EXT, D_MODEL), lambda g: (0, 0)),      # resident fused table
        ],
        out_specs=pl.BlockSpec((rows, D_MODEL), lambda g: (g, 0)),
        compiler_params=pltpu.CompilerParams(dimension_semantics=("parallel",)),
    )(ids, w_ext)

    return out.reshape(b_pad, S, D_MODEL)[:B]


def reference_token_embedding(obss, actions, act_table, obs_table, w_obs, b_obs, pos):
    """Plain-JAX reference matching the PyTorch DTQN front-end (eval mode)."""
    B = obss.shape[0]
    obs_e = jnp.take(obs_table, obss, axis=0)                    # (B, 12, 12, 16)
    obs_f = obs_e.reshape(B, OBS_DIM, OBS_DIM * EMBED_SIZE)      # Flatten(start_dim=-2)
    obs_p = jnp.einsum("bsf,fd->bsd", obs_f, w_obs, precision="highest") + b_obs
    act_e = jnp.take(act_table, actions[..., 0], axis=0)         # (B, 12, 128)
    act_e = jnp.roll(act_e, 1, axis=1)
    act_e = act_e.at[:, 0, :].set(0.0)
    tok = jnp.concatenate([act_e, obs_p], axis=-1)               # (B, 12, 512)
    return tok + pos[None]


if __name__ == "__main__":
    key = jax.random.PRNGKey(0)
    k1, k2, k3, k4, k5, k6 = jax.random.split(key, 6)

    B = 32  # module-level `batch`
    obss = jax.random.randint(k1, (B, OBS_DIM, OBS_DIM), 0, VOCAB, dtype=jnp.int32)
    actions = jax.random.randint(k2, (B, OBS_DIM, 1), 0, NUM_ACTIONS, dtype=jnp.int32)

    # init_weights: normal(std=0.02) for Embedding / Linear weights (bias randomized here to
    # exercise the bias path).
    act_table = 0.02 * jax.random.normal(k3, (NUM_ACTIONS, ACTION_DIM), jnp.float32)
    obs_table = 0.02 * jax.random.normal(k4, (VOCAB, EMBED_SIZE), jnp.float32)
    w_obs = 0.02 * jax.random.normal(k5, (EMBED_SIZE * OBS_DIM, OBS_EMBED_DIM), jnp.float32)
    b_obs = 0.02 * jax.random.normal(k6, (OBS_EMBED_DIM,), jnp.float32)
    pos = make_position_encoding()

    out = jax.jit(dtqn_token_embedding)(obss, actions, act_table, obs_table, w_obs, b_obs, pos)
    out = jax.block_until_ready(out)

    ref = reference_token_embedding(obss, actions, act_table, obs_table, w_obs, b_obs, pos)
    assert out.shape == (B, OBS_DIM, D_MODEL)
    err = float(jnp.max(jnp.abs(out - ref)))
    assert jnp.allclose(out, ref, atol=5e-4, rtol=1e-4), err

    print("KERNEL_OK")
</pallas_src>

<mosaic_0001>
module attributes {stable_mosaic.version = 11 : i64} {
  func.func @_token_embedding_kernel(%arg0: i32, %arg1: memref<192x14xi32, #tpu.memory_space<vmem>>, %arg2: memref<256x512xf32, #tpu.memory_space<vmem>>, %arg3: memref<192x512xf32, #tpu.memory_space<vmem>>) attributes {dimension_semantics = [#tpu.dimension_semantics<parallel>], iteration_bounds = array<i64: 2>, scalar_prefetch = 0 : i64, scratch_operands = 0 : i64, tpu.core_type = #tpu.core_type<tc>, window_params = [{transform_indices = @transform_0, window_bounds = array<i64: 192, 14>}, {pipeline_mode = #tpu.pipeline_mode<synchronous>, transform_indices = @transform_1, window_bounds = array<i64: 256, 512>}, {transform_indices = @transform_2, window_bounds = array<i64: 192, 512>}]} {
    %c0 = arith.constant 0 : index
    %c0_0 = arith.constant 0 : index
    %0 = vector.load %arg1[%c0, %c0_0] : memref<192x14xi32, #tpu.memory_space<vmem>>, vector<192x14xi32>
    %1 = tpu.iota {dimensions = array<i32: 1>} : vector<192x128xi32>
    %2 = vector.extract_strided_slice %0 {offsets = [0, 0], sizes = [192, 1], strides = [1, 1]} : vector<192x14xi32> to vector<192x1xi32>
    %3 = vector.broadcast %2 : vector<192x1xi32> to vector<192x128xi32>
    %4 = arith.cmpi eq, %3, %1 : vector<192x128xi32>
    %cst = arith.constant 1.000000e+00 : f32
    %cst_1 = arith.constant 0.000000e+00 : f32
    %5 = vector.broadcast %cst : f32 to vector<192x128xf32>
    %6 = vector.broadcast %cst_1 : f32 to vector<192x128xf32>
    %7 = arith.select %4, %5, %6 : vector<192x128xi1>, vector<192x128xf32>
    %8 = vector.extract_strided_slice %0 {offsets = [0, 1], sizes = [192, 1], strides = [1, 1]} : vector<192x14xi32> to vector<192x1xi32>
    %9 = vector.broadcast %8 : vector<192x1xi32> to vector<192x128xi32>
    %10 = arith.cmpi eq, %9, %1 : vector<192x128xi32>
    %cst_2 = arith.constant 1.000000e+00 : f32
    %cst_3 = arith.constant 0.000000e+00 : f32
    %11 = vector.broadcast %cst_2 : f32 to vector<192x128xf32>
    %12 = vector.broadcast %cst_3 : f32 to vector<192x128xf32>
    %13 = arith.select %10, %11, %12 : vector<192x128xi1>, vector<192x128xf32>
    %14 = vector.extract_strided_slice %0 {offsets = [0, 2], sizes = [192, 1], strides = [1, 1]} : vector<192x14xi32> to vector<192x1xi32>
    %15 = vector.broadcast %14 : vector<192x1xi32> to vector<192x128xi32>
    %16 = arith.cmpi eq, %15, %1 : vector<192x128xi32>
    %cst_4 = arith.constant 1.000000e+00 : f32
    %cst_5 = arith.constant 0.000000e+00 : f32
    %17 = vector.broadcast %cst_4 : f32 to vector<192x128xf32>
    %18 = vector.broadcast %cst_5 : f32 to vector<192x128xf32>
    %19 = arith.select %16, %17, %18 : vector<192x128xi1>, vector<192x128xf32>
    %20 = vector.extract_strided_slice %0 {offsets = [0, 3], sizes = [192, 1], strides = [1, 1]} : vector<192x14xi32> to vector<192x1xi32>
    %21 = vector.broadcast %20 : vector<192x1xi32> to vector<192x128xi32>
    %22 = arith.cmpi eq, %21, %1 : vector<192x128xi32>
    %cst_6 = arith.constant 1.000000e+00 : f32
    %cst_7 = arith.constant 0.000000e+00 : f32
    %23 = vector.broadcast %cst_6 : f32 to vector<192x128xf32>
    %24 = vector.broadcast %cst_7 : f32 to vector<192x128xf32>
    %25 = arith.select %22, %23, %24 : vector<192x128xi1>, vector<192x128xf32>
    %26 = vector.extract_strided_slice %0 {offsets = [0, 4], sizes = [192, 1], strides = [1, 1]} : vector<192x14xi32> to vector<192x1xi32>
    %27 = vector.broadcast %26 : vector<192x1xi32> to vector<192x128xi32>
    %28 = arith.cmpi eq, %27, %1 : vector<192x128xi32>
    %cst_8 = arith.constant 1.000000e+00 : f32
    %cst_9 = arith.constant 0.000000e+00 : f32
    %29 = vector.broadcast %cst_8 : f32 to vector<192x128xf32>
    %30 = vector.broadcast %cst_9 : f32 to vector<192x128xf32>
    %31 = arith.select %28, %29, %30 : vector<192x128xi1>, vector<192x128xf32>
    %32 = vector.extract_strided_slice %0 {offsets = [0, 5], sizes = [192, 1], strides = [1, 1]} : vector<192x14xi32> to vector<192x1xi32>
    %33 = vector.broadcast %32 : vector<192x1xi32> to vector<192x128xi32>
    %34 = arith.cmpi eq, %33, %1 : vector<192x128xi32>
    %cst_10 = arith.constant 1.000000e+00 : f32
    %cst_11 = arith.constant 0.000000e+00 : f32
    %35 = vector.broadcast %cst_10 : f32 to vector<192x128xf32>
    %36 = vector.broadcast %cst_11 : f32 to vector<192x128xf32>
    %37 = arith.select %34, %35, %36 : vector<192x128xi1>, vector<192x128xf32>
    %38 = vector.extract_strided_slice %0 {offsets = [0, 6], sizes = [192, 1], strides = [1, 1]} : vector<192x14xi32> to vector<192x1xi32>
    %39 = vector.broadcast %38 : vector<192x1xi32> to vector<192x128xi32>
    %40 = arith.cmpi eq, %39, %1 : vector<192x128xi32>
    %cst_12 = arith.constant 1.000000e+00 : f32
    %cst_13 = arith.constant 0.000000e+00 : f32
    %41 = vector.broadcast %cst_12 : f32 to vector<192x128xf32>
    %42 = vector.broadcast %cst_13 : f32 to vector<192x128xf32>
    %43 = arith.select %40, %41, %42 : vector<192x128xi1>, vector<192x128xf32>
    %44 = vector.extract_strided_slice %0 {offsets = [0, 7], sizes = [192, 1], strides = [1, 1]} : vector<192x14xi32> to vector<192x1xi32>
    %45 = vector.broadcast %44 : vector<192x1xi32> to vector<192x128xi32>
    %46 = arith.cmpi eq, %45, %1 : vector<192x128xi32>
    %cst_14 = arith.constant 1.000000e+00 : f32
    %cst_15 = arith.constant 0.000000e+00 : f32
    %47 = vector.broadcast %cst_14 : f32 to vector<192x128xf32>
    %48 = vector.broadcast %cst_15 : f32 to vector<192x128xf32>
    %49 = arith.select %46, %47, %48 : vector<192x128xi1>, vector<192x128xf32>
    %50 = vector.extract_strided_slice %0 {offsets = [0, 8], sizes = [192, 1], strides = [1, 1]} : vector<192x14xi32> to vector<192x1xi32>
    %51 = vector.broadcast %50 : vector<192x1xi32> to vector<192x128xi32>
    %52 = arith.cmpi eq, %51, %1 : vector<192x128xi32>
    %cst_16 = arith.constant 1.000000e+00 : f32
    %cst_17 = arith.constant 0.000000e+00 : f32
    %53 = vector.broadcast %cst_16 : f32 to vector<192x128xf32>
    %54 = vector.broadcast %cst_17 : f32 to vector<192x128xf32>
    %55 = arith.select %52, %53, %54 : vector<192x128xi1>, vector<192x128xf32>
    %56 = vector.extract_strided_slice %0 {offsets = [0, 9], sizes = [192, 1], strides = [1, 1]} : vector<192x14xi32> to vector<192x1xi32>
    %57 = vector.broadcast %56 : vector<192x1xi32> to vector<192x128xi32>
    %58 = arith.cmpi eq, %57, %1 : vector<192x128xi32>
    %cst_18 = arith.constant 1.000000e+00 : f32
    %cst_19 = arith.constant 0.000000e+00 : f32
    %59 = vector.broadcast %cst_18 : f32 to vector<192x128xf32>
    %60 = vector.broadcast %cst_19 : f32 to vector<192x128xf32>
    %61 = arith.select %58, %59, %60 : vector<192x128xi1>, vector<192x128xf32>
    %62 = vector.extract_strided_slice %0 {offsets = [0, 10], sizes = [192, 1], strides = [1, 1]} : vector<192x14xi32> to vector<192x1xi32>
    %63 = vector.broadcast %62 : vector<192x1xi32> to vector<192x128xi32>
    %64 = arith.cmpi eq, %63, %1 : vector<192x128xi32>
    %cst_20 = arith.constant 1.000000e+00 : f32
    %cst_21 = arith.constant 0.000000e+00 : f32
    %65 = vector.broadcast %cst_20 : f32 to vector<192x128xf32>
    %66 = vector.broadcast %cst_21 : f32 to vector<192x128xf32>
    %67 = arith.select %64, %65, %66 : vector<192x128xi1>, vector<192x128xf32>
    %68 = vector.extract_strided_slice %0 {offsets = [0, 11], sizes = [192, 1], strides = [1, 1]} : vector<192x14xi32> to vector<192x1xi32>
    %69 = vector.broadcast %68 : vector<192x1xi32> to vector<192x128xi32>
    %70 = arith.cmpi eq, %69, %1 : vector<192x128xi32>
    %cst_22 = arith.constant 1.000000e+00 : f32
    %cst_23 = arith.constant 0.000000e+00 : f32
    %71 = vector.broadcast %cst_22 : f32 to vector<192x128xf32>
    %72 = vector.broadcast %cst_23 : f32 to vector<192x128xf32>
    %73 = arith.select %70, %71, %72 : vector<192x128xi1>, vector<192x128xf32>
    %74 = arith.addf %7, %13 : vector<192x128xf32>
    %75 = arith.addf %19, %25 : vector<192x128xf32>
    %76 = arith.addf %31, %37 : vector<192x128xf32>
    %77 = arith.addf %43, %49 : vector<192x128xf32>
    %78 = arith.addf %55, %61 : vector<192x128xf32>
    %79 = arith.addf %67, %73 : vector<192x128xf32>
    %80 = arith.addf %74, %75 : vector<192x128xf32>
    %81 = arith.addf %76, %77 : vector<192x128xf32>
    %82 = arith.addf %78, %79 : vector<192x128xf32>
    %83 = arith.addf %80, %81 : vector<192x128xf32>
    %84 = arith.addf %83, %82 : vector<192x128xf32>
    %85 = vector.extract_strided_slice %0 {offsets = [0, 12], sizes = [192, 1], strides = [1, 1]} : vector<192x14xi32> to vector<192x1xi32>
    %86 = vector.broadcast %85 : vector<192x1xi32> to vector<192x128xi32>
    %87 = arith.cmpi eq, %86, %1 : vector<192x128xi32>
    %cst_24 = arith.constant 1.000000e+00 : f32
    %cst_25 = arith.constant 0.000000e+00 : f32
    %88 = vector.broadcast %cst_24 : f32 to vector<192x128xf32>
    %89 = vector.broadcast %cst_25 : f32 to vector<192x128xf32>
    %90 = arith.select %87, %88, %89 : vector<192x128xi1>, vector<192x128xf32>
    %91 = vector.extract_strided_slice %0 {offsets = [0, 13], sizes = [192, 1], strides = [1, 1]} : vector<192x14xi32> to vector<192x1xi32>
    %92 = vector.broadcast %91 : vector<192x1xi32> to vector<192x128xi32>
    %93 = arith.cmpi eq, %92, %1 : vector<192x128xi32>
    %cst_26 = arith.constant 1.000000e+00 : f32
    %cst_27 = arith.constant 0.000000e+00 : f32
    %94 = vector.broadcast %cst_26 : f32 to vector<192x128xf32>
    %95 = vector.broadcast %cst_27 : f32 to vector<192x128xf32>
    %96 = arith.select %93, %94, %95 : vector<192x128xi1>, vector<192x128xf32>
    %97 = arith.addf %90, %96 : vector<192x128xf32>
    %98 = tpu.concatenate %84, %97 in 1 : vector<192x128xf32>, vector<192x128xf32> -> vector<192x256xf32>
    %c0_28 = arith.constant 0 : index
    %c0_29 = arith.constant 0 : index
    %99 = vector.load %arg2[%c0_28, %c0_29] : memref<256x512xf32, #tpu.memory_space<vmem>>, vector<256x512xf32>
    %cst_30 = arith.constant dense<0.000000e+00> : vector<192x512xf32>
    %100 = tpu.matmul %98, %99, %cst_30 {dimension_numbers = #tpu.dot_dimension_numbers<[1], [0], [0], [1], [0, 0, 1, 1], [], []>} : vector<192x256xf32>, vector<256x512xf32>, vector<192x512xf32> -> vector<192x512xf32>
    %c0_31 = arith.constant 0 : index
    %c0_32 = arith.constant 0 : index
    %101 = vector.load %arg3[%c0_31, %c0_32] : memref<192x512xf32, #tpu.memory_space<vmem>>, vector<192x512xf32>
    tpu.vector_store %arg3[%c0_31, %c0_32], %100 {strides = array<i32>} : memref<192x512xf32, #tpu.memory_space<vmem>>, vector<192x512xf32>,
    return
  }
  func.func @transform_0(%arg0: i32) -> (i32, i32) {
    %c0_i32 = arith.constant 0 : i32
    %c0_i32_0 = arith.constant 0 : i32
    return %arg0, %c0_i32 : i32, i32
  }
  func.func @transform_1(%arg0: i32) -> (i32, i32) {
    %c0_i32 = arith.constant 0 : i32
    %c0_i32_0 = arith.constant 0 : i32
    %c0_i32_1 = arith.constant 0 : i32
    return %c0_i32, %c0_i32_0 : i32, i32
  }
  func.func @transform_2(%arg0: i32) -> (i32, i32) {
    %c0_i32 = arith.constant 0 : i32
    %c0_i32_0 = arith.constant 0 : i32
    return %arg0, %c0_i32 : i32, i32
  }
}

</mosaic_0001>

<llo_original>
// kernel: dtqn_token_embedding.1
$region0: #{dtqn_token_embedding.1}
  #allocation0 [shape = 'u32[]', space=smem, size = 0x4, offset = 0x4, fixed_abs, tag = 'smem constant byte address 0x4 - core index']
  #allocation1 [shape = 'u32[144,128]{1,0:T(1,128)}', space=vmem, size = 0x12000, scoped, tag = 'internal scratch']
  %s0 = inlined_call_operand.vmem [shape: s32[384,14], index: 0, kind: input, shape index: {}]
  %s1 = inlined_call_operand.vmem [shape: f32[256,512], index: 1, kind: input, shape index: {}]
  %s2 = inlined_call_operand.vmem [shape: f32[384,512], index: 2, kind: output, shape index: {}]
  %s3 = sld [smem:[#allocation0]]
  $region41: #{dtqn_token_embedding.1} parent=0
    _
  %s5 = ssub.s32 1, %s3
  %s6 = scalar_select 0, %s5, %s3
  loop: start=0, step=1, limit=4
  $region2: #{dtqn_token_embedding.1} parent=0 // loop_pre_header
    _
  $region3: #{dtqn_token_embedding.1} parent=0 // loop_header
    %s8 = sphi 0, %s12
    %p9 = scmp.ge.s32.totalorder %s8, 4
    %s18 = sphi 0, %s20
    %s21 = sphi 0, %s18
    %s22 = sphi 0, %s21
    %s38 = sphi 0, %s22
    %s42 = sphi 0, %s42
    %s44 = sphi 0, %s42
    %s45 = sphi 0, %s44
    %s59 = sphi 0, %s45
    %s65 = sphi 0, %s67
    %s68 = sphi 0, %s65
    %s69 = sphi 0, %s68
    %s85 = sphi 0, %s69
  $region4: #{dtqn_token_embedding.1} parent=0 // loop_header_branch
    %11 = sbr.rel (%p9) target = $region8
  $region5: #{dtqn_token_embedding.1} parent=0 // loop_body
    %s13 = ssub.s32 %s8, 1
    %s14 = ssub.s32 %s8, 2
    %s15 = sadd.s32 %s8, 1
    %s16 = ssub.s32 %s8, %s15
    %p17 = scmp.eq.s32.totalorder %s16, 0
    %s19 = sadd.s32 %s18, 1
    %s20 = scalar_select %p17, %s18, %s19
    %p23 = pneg %p17
    %p24 = scmp.eq.s32.totalorder %s8, 1
    %p25 = por %p23, %p24
    %p26 = scmp.ne.s32.totalorder %s18, %s21
    %p27 = scmp.eq.s32.totalorder %s8, 0
    %p28 = por %p26, %p27
    %p29 = scmp.ne.s32.totalorder %s18, %s21
    %p30 = scmp.eq.s32.totalorder %s13, 1
    %p31 = por %p29, %p30
    %p32 = scmp.ne.s32.totalorder %s21, %s22
    %p33 = scmp.eq.s32.totalorder %s13, 0
    %p34 = por %p32, %p33
    %p35 = scmp.ne.s32.totalorder %s21, %s22
    %p36 = scmp.eq.s32.totalorder %s14, 1
    %p37 = por %p35, %p36
    %p39 = scmp.ne.s32.totalorder %s22, %s38
    %p40 = scmp.eq.s32.totalorder %s14, 0
    %p41 = por %p39, %p40
    %s43 = sadd.s32 %s42, 1
    %p46 = scmp.eq.s32.totalorder %s8, 1
    %p47 = scmp.ne.s32.totalorder %s42, %s44
    %p48 = scmp.eq.s32.totalorder %s8, 0
    %p49 = por %p47, %p48
    %p50 = scmp.ne.s32.totalorder %s42, %s44
    %p51 = scmp.eq.s32.totalorder %s13, 1
    %p52 = por %p50, %p51
    %p53 = scmp.ne.s32.totalorder %s44, %s45
    %p54 = scmp.eq.s32.totalorder %s13, 0
    %p55 = por %p53, %p54
    %p56 = scmp.ne.s32.totalorder %s44, %s45
    %p57 = scmp.eq.s32.totalorder %s14, 1
    %p58 = por %p56, %p57
    %p60 = scmp.ne.s32.totalorder %s45, %s59
    %p61 = scmp.eq.s32.totalorder %s14, 0
    %p62 = por %p60, %p61
    %s63 = ssub.s32 %s8, %s15
    %p64 = scmp.eq.s32.totalorder %s63, 0
    %s66 = sadd.s32 %s65, 1
    %s67 = scalar_select %p64, %s65, %s66
    %p70 = pneg %p64
    %p71 = scmp.eq.s32.totalorder %s8, 1
    %p72 = por %p70, %p71
    %p73 = scmp.ne.s32.totalorder %s65, %s68
    %p74 = scmp.eq.s32.totalorder %s8, 0
    %p75 = por %p73, %p74
    %p76 = scmp.ne.s32.totalorder %s65, %s68
    %p77 = scmp.eq.s32.totalorder %s13, 1
    %p78 = por %p76, %p77
    %p79 = scmp.ne.s32.totalorder %s68, %s69
    %p80 = scmp.eq.s32.totalorder %s13, 0
    %p81 = por %p79, %p80
    %p82 = scmp.ne.s32.totalorder %s68, %s69
    %p83 = scmp.eq.s32.totalorder %s14, 1
    %p84 = por %p82, %p83
    %p86 = scmp.ne.s32.totalorder %s69, %s85
    %p87 = scmp.eq.s32.totalorder %s14, 0
    %p88 = por %p86, %p87
    %p89 = scmp.le.s32.totalorder 1, %s8
    %p90 = scmp.lt.s32.totalorder %s8, 3
    %p91 = pnand %p89, %p90
    %p92 = pneg %p91
    // Predicated region
    $region9: #{dtqn_token_embedding.1} parent=5 // pred_check
      _
    $region10: #{dtqn_token_embedding.1} parent=5 // pred_check_branch
      %94 = sbr.rel (%p91) target = $region12
    $region11: #{dtqn_token_embedding.1} parent=5 // pred_region
      %s95 = ssub.s32 %s8, 1
      // Predicated region
      $region13: #{dtqn_token_embedding.1} parent=11 // pred_check
        %p96 = pneg %p55
      $region14: #{dtqn_token_embedding.1} parent=11 // pred_check_branch
        %98 = sbr.rel (%p96) target = $region16
      $region15: #{dtqn_token_embedding.1} parent=11 // pred_region
        _
      $region16: #{dtqn_token_embedding.1} parent=11 // pred_fallthru
        _
    $region12: #{dtqn_token_embedding.1} parent=5 // pred_fallthru
      _
    %p99 = scmp.lt.s32.totalorder %s8, 2
    // Predicated region
    $region17: #{dtqn_token_embedding.1} parent=5 // pred_check
      %p100 = pneg %p99
    $region18: #{dtqn_token_embedding.1} parent=5 // pred_check_branch
      %102 = sbr.rel (%p100) target = $region20
    $region19: #{dtqn_token_embedding.1} parent=5 // pred_region
      // Predicated region
      $region21: #{dtqn_token_embedding.1} parent=19 // pred_check
        %p103 = pneg %p28
      $region22: #{dtqn_token_embedding.1} parent=19 // pred_check_branch
        %105 = sbr.rel (%p103) target = $region24
      $region23: #{dtqn_token_embedding.1} parent=19 // pred_region
        %s106 = smul.u32 24, %s8
        %p107 = scmp.lt.s32.totalorder %s106, 47
        %s108 = scalar_select %p107, %s106, 47
        %s109 = smul.addr %s108, 8
        %s110 = scalar_lea.vmem %s0, %s109
        %s111 = smul.u32 24, %s8
      $region24: #{dtqn_token_embedding.1} parent=19 // pred_fallthru
        _
    $region20: #{dtqn_token_embedding.1} parent=5 // pred_fallthru
      _
    %p112 = scmp.le.s32.totalorder 1, %s8
    %p113 = scmp.lt.s32.totalorder %s8, 3
    %p114 = pnand %p112, %p113
    %p115 = pneg %p114
    // Predicated region
    $region25: #{dtqn_token_embedding.1} parent=5 // pred_check
      _
    $region26: #{dtqn_token_embedding.1} parent=5 // pred_check_branch
      %117 = sbr.rel (%p114) target = $region28
    $region27: #{dtqn_token_embedding.1} parent=5 // pred_region
      %s118 = ssub.s32 %s8, 1
      %s119 = smul.u32 24, %s13
      %p120 = scmp.lt.s32.totalorder %s119, 47
      %s121 = scalar_select %p120, %s119, 47
      %s122 = smul.addr %s121, 8
      %s123 = scalar_lea.vmem %s0, %s122
      %p124 = pneg %p34
      %p125 = pneg %p31
      %p126 = pneg %p55
      %p127 = pneg %p52
      %p128 = pneg %p81
      %p129 = pneg %p78
      %s130 = smul.u32 24, %s13
      %p131 = scmp.lt.s32.totalorder %s130, 47
      %s132 = scalar_select %p131, %s130, 47
      %s133 = smul.addr %s132, 4
      %s134 = smul.addr %s133, 8
      %s135 = scalar_lea.vmem %s2, %s134
      %s136 = smul.u32 24, %s13
      %p137 = scmp.lt.s32.totalorder %s136, 47
      %s138 = scalar_select %p137, %s136, 47
      %s139 = smul.addr %s138, 8
      %s140 = scalar_lea.vmem %s0, %s139
      %s141 = smul.u32 24, %s13
      %s142 = smul.u32 24, %s13
      %p143 = scmp.lt.s32.totalorder %s142, 47
      %s144 = scalar_select %p143, %s142, 47
      %s145 = smul.addr %s144, 4
      %s146 = smul.addr %s145, 8
      %s147 = scalar_lea.vmem %s2, %s146
      %s148 = smul.u32 24, %s13
      %v149 = vld [vmem:[%s140] sm:$0xff]
      %v150 = vld [vmem:[%s140 + $0x8] sm:$0xff]
      %v151 = vld [vmem:[%s140 + $0x10] sm:$0xff]
      %v152 = vld [vmem:[%s140 + $0x18] sm:$0xff]
      %v153 = vld [vmem:[%s140 + $0x20] sm:$0xff]
      %v154 = vld [vmem:[%s140 + $0x28] sm:$0xff]
      %v155 = vld [vmem:[%s140 + $0x30] sm:$0xff]
      %v156 = vld [vmem:[%s140 + $0x38] sm:$0xff]
      %v157 = vld [vmem:[%s140 + $0x40] sm:$0xff]
      %v158 = vld [vmem:[%s140 + $0x48] sm:$0xff]
      %v159 = vld [vmem:[%s140 + $0x50] sm:$0xff]
      %v160 = vld [vmem:[%s140 + $0x58] sm:$0xff]
      %v161 = vld [vmem:[%s140 + $0x60] sm:$0xff]
      %v162 = vld [vmem:[%s140 + $0x68] sm:$0xff]
      %v163 = vld [vmem:[%s140 + $0x70] sm:$0xff]
      %v164 = vld [vmem:[%s140 + $0x78] sm:$0xff]
      %v165 = vld [vmem:[%s140 + $0x80] sm:$0xff]
      %v166 = vld [vmem:[%s140 + $0x88] sm:$0xff]
      %v167 = vld [vmem:[%s140 + $0x90] sm:$0xff]
      %v168 = vld [vmem:[%s140 + $0x98] sm:$0xff]
      %v169 = vld [vmem:[%s140 + $0xa0] sm:$0xff]
      %v170 = vld [vmem:[%s140 + $0xa8] sm:$0xff]
      %v171 = vld [vmem:[%s140 + $0xb0] sm:$0xff]
      %v172 = vld [vmem:[%s140 + $0xb8] sm:$0xff]
      %v173 = vlaneseq
      %v174 = vand.u32 %v173, 127
      %175 = vset.pattern.permute.xlu0 0
      %176 = vperm.xlu0 %175, %v149
      %v177 = vpop.permute.xlu0 %176
      %178 = vset.pattern.permute.xlu0 0
      %179 = vperm.xlu0 %178, %v150
      %v180 = vpop.permute.xlu0 %179
      %181 = vset.pattern.permute.xlu0 0
      %182 = vperm.xlu0 %181, %v151
      %v183 = vpop.permute.xlu0 %182
      %184 = vset.pattern.permute.xlu0 0
      %185 = vperm.xlu0 %184, %v152
      %v186 = vpop.permute.xlu0 %185
      %187 = vset.pattern.permute.xlu0 0
      %188 = vperm.xlu0 %187, %v153
      %v189 = vpop.permute.xlu0 %188
      %190 = vset.pattern.permute.xlu0 0
      %191 = vperm.xlu0 %190, %v154
      %v192 = vpop.permute.xlu0 %191
      %193 = vset.pattern.permute.xlu0 0
      %194 = vperm.xlu0 %193, %v155
      %v195 = vpop.permute.xlu0 %194
      %196 = vset.pattern.permute.xlu0 0
      %197 = vperm.xlu0 %196, %v156
      %v198 = vpop.permute.xlu0 %197
      %199 = vset.pattern.permute.xlu0 0
      %200 = vperm.xlu0 %199, %v157
      %v201 = vpop.permute.xlu0 %200
      %202 = vset.pattern.permute.xlu0 0
      %203 = vperm.xlu0 %202, %v158
      %v204 = vpop.permute.xlu0 %203
      %205 = vset.pattern.permute.xlu0 0
      %206 = vperm.xlu0 %205, %v159
      %v207 = vpop.permute.xlu0 %206
      %208 = vset.pattern.permute.xlu0 0
      %209 = vperm.xlu0 %208, %v160
      %v210 = vpop.permute.xlu0 %209
      %211 = vset.pattern.permute.xlu0 0
      %212 = vperm.xlu0 %211, %v161
      %v213 = vpop.permute.xlu0 %212
      %214 = vset.pattern.permute.xlu0 0
      %215 = vperm.xlu0 %214, %v162
      %v216 = vpop.permute.xlu0 %215
      %217 = vset.pattern.permute.xlu0 0
      %218 = vperm.xlu0 %217, %v163
      %v219 = vpop.permute.xlu0 %218
      %220 = vset.pattern.permute.xlu0 0
      %221 = vperm.xlu0 %220, %v164
      %v222 = vpop.permute.xlu0 %221
      %223 = vset.pattern.permute.xlu0 0
      %224 = vperm.xlu0 %223, %v165
      %v225 = vpop.permute.xlu0 %224
      %226 = vset.pattern.permute.xlu0 0
      %227 = vperm.xlu0 %226, %v166
      %v228 = vpop.permute.xlu0 %227
      %229 = vset.pattern.permute.xlu0 0
      %230 = vperm.xlu0 %229, %v167
      %v231 = vpop.permute.xlu0 %230
      %232 = vset.pattern.permute.xlu0 0
      %233 = vperm.xlu0 %232, %v168
      %v234 = vpop.permute.xlu0 %233
      %235 = vset.pattern.permute.xlu0 0
      %236 = vperm.xlu0 %235, %v169
      %v237 = vpop.permute.xlu0 %236
      %238 = vset.pattern.permute.xlu0 0
      %239 = vperm.xlu0 %238, %v170
      %v240 = vpop.permute.xlu0 %239
      %241 = vset.pattern.permute.xlu0 0
      %242 = vperm.xlu0 %241, %v171
      %v243 = vpop.permute.xlu0 %242
      %244 = vset.pattern.permute.xlu0 0
      %245 = vperm.xlu0 %244, %v172
      %v246 = vpop.permute.xlu0 %245
      %vm247 = vcmp.eq.s32.totalorder %v177, %v174
      %vm248 = vcmp.eq.s32.totalorder %v180, %v174
      %vm249 = vcmp.eq.s32.totalorder %v183, %v174
      %vm250 = vcmp.eq.s32.totalorder %v186, %v174
      %vm251 = vcmp.eq.s32.totalorder %v189, %v174
      %vm252 = vcmp.eq.s32.totalorder %v192, %v174
      %vm253 = vcmp.eq.s32.totalorder %v195, %v174
      %vm254 = vcmp.eq.s32.totalorder %v198, %v174
      %vm255 = vcmp.eq.s32.totalorder %v201, %v174
      %vm256 = vcmp.eq.s32.totalorder %v204, %v174
      %vm257 = vcmp.eq.s32.totalorder %v207, %v174
      %vm258 = vcmp.eq.s32.totalorder %v210, %v174
      %vm259 = vcmp.eq.s32.totalorder %v213, %v174
      %vm260 = vcmp.eq.s32.totalorder %v216, %v174
      %vm261 = vcmp.eq.s32.totalorder %v219, %v174
      %vm262 = vcmp.eq.s32.totalorder %v222, %v174
      %vm263 = vcmp.eq.s32.totalorder %v225, %v174
      %vm264 = vcmp.eq.s32.totalorder %v228, %v174
      %vm265 = vcmp.eq.s32.totalorder %v231, %v174
      %vm266 = vcmp.eq.s32.totalorder %v234, %v174
      %vm267 = vcmp.eq.s32.totalorder %v237, %v174
      %vm268 = vcmp.eq.s32.totalorder %v240, %v174
      %vm269 = vcmp.eq.s32.totalorder %v243, %v174
      %vm270 = vcmp.eq.s32.totalorder %v246, %v174
      %v271 = vsel %vm247, 1.0, 0.0
      %v272 = vsel %vm248, 1.0, 0.0
      %v273 = vsel %vm249, 1.0, 0.0
      %v274 = vsel %vm250, 1.0, 0.0
      %v275 = vsel %vm251, 1.0, 0.0
      %v276 = vsel %vm252, 1.0, 0.0
      %v277 = vsel %vm253, 1.0, 0.0
      %v278 = vsel %vm254, 1.0, 0.0
      %v279 = vsel %vm255, 1.0, 0.0
      %v280 = vsel %vm256, 1.0, 0.0
      %v281 = vsel %vm257, 1.0, 0.0
      %v282 = vsel %vm258, 1.0, 0.0
      %v283 = vsel %vm259, 1.0, 0.0
      %v284 = vsel %vm260, 1.0, 0.0
      %v285 = vsel %vm261, 1.0, 0.0
      %v286 = vsel %vm262, 1.0, 0.0
      %v287 = vsel %vm263, 1.0, 0.0
      %v288 = vsel %vm264, 1.0, 0.0
      %v289 = vsel %vm265, 1.0, 0.0
      %v290 = vsel %vm266, 1.0, 0.0
      %v291 = vsel %vm267, 1.0, 0.0
      %v292 = vsel %vm268, 1.0, 0.0
      %v293 = vsel %vm269, 1.0, 0.0
      %v294 = vsel %vm270, 1.0, 0.0
      %295 = vset.pattern.permute.xlu0 1
      %296 = vperm.xlu0 %295, %v149
      %v297 = vpop.permute.xlu0 %296
      %298 = vset.pattern.permute.xlu0 1
      %299 = vperm.xlu0 %298, %v150
      %v300 = vpop.permute.xlu0 %299
      %301 = vset.pattern.permute.xlu0 1
      %302 = vperm.xlu0 %301, %v151
      %v303 = vpop.permute.xlu0 %302
      %304 = vset.pattern.permute.xlu0 1
      %305 = vperm.xlu0 %304, %v152
      %v306 = vpop.permute.xlu0 %305
      %307 = vset.pattern.permute.xlu0 1
      %308 = vperm.xlu0 %307, %v153
      %v309 = vpop.permute.xlu0 %308
      %310 = vset.pattern.permute.xlu0 1
      %311 = vperm.xlu0 %310, %v154
      %v312 = vpop.permute.xlu0 %311
      %313 = vset.pattern.permute.xlu0 1
      %314 = vperm.xlu0 %313, %v155
      %v315 = vpop.permute.xlu0 %314
      %316 = vset.pattern.permute.xlu0 1
      %317 = vperm.xlu0 %316, %v156
      %v318 = vpop.permute.xlu0 %317
      %319 = vset.pattern.permute.xlu0 1
      %320 = vperm.xlu0 %319, %v157
      %v321 = vpop.permute.xlu0 %320
      %322 = vset.pattern.permute.xlu0 1
      %323 = vperm.xlu0 %322, %v158
      %v324 = vpop.permute.xlu0 %323
      %325 = vset.pattern.permute.xlu0 1
      %326 = vperm.xlu0 %325, %v159
      %v327 = vpop.permute.xlu0 %326
      %328 = vset.pattern.permute.xlu0 1
      %329 = vperm.xlu0 %328, %v160
      %v330 = vpop.permute.xlu0 %329
      %331 = vset.pattern.permute.xlu0 1
      %332 = vperm.xlu0 %331, %v161
      %v333 = vpop.permute.xlu0 %332
      %334 = vset.pattern.permute.xlu0 1
      %335 = vperm.xlu0 %334, %v162
      %v336 = vpop.permute.xlu0 %335
      %337 = vset.pattern.permute.xlu0 1
      %338 = vperm.xlu0 %337, %v163
      %v339 = vpop.permute.xlu0 %338
      %340 = vset.pattern.permute.xlu0 1
      %341 = vperm.xlu0 %340, %v164
      %v342 = vpop.permute.xlu0 %341
      %343 = vset.pattern.permute.xlu0 1
      %344 = vperm.xlu0 %343, %v165
      %v345 = vpop.permute.xlu0 %344
      %346 = vset.pattern.permute.xlu0 1
      %347 = vperm.xlu0 %346, %v166
      %v348 = vpop.permute.xlu0 %347
      %349 = vset.pattern.permute.xlu0 1
      %350 = vperm.xlu0 %349, %v167
      %v351 = vpop.permute.xlu0 %350
      %352 = vset.pattern.permute.xlu0 1
      %353 = vperm.xlu0 %352, %v168
      %v354 = vpop.permute.xlu0 %353
      %355 = vset.pattern.permute.xlu0 1
      %356 = vperm.xlu0 %355, %v169
      %v357 = vpop.permute.xlu0 %356
      %358 = vset.pattern.permute.xlu0 1
      %359 = vperm.xlu0 %358, %v170
      %v360 = vpop.permute.xlu0 %359
      %361 = vset.pattern.permute.xlu0 1
      %362 = vperm.xlu0 %361, %v171
      %v363 = vpop.permute.xlu0 %362
      %364 = vset.pattern.permute.xlu0 1
      %365 = vperm.xlu0 %364, %v172
      %v366 = vpop.permute.xlu0 %365
      %vm367 = vcmp.eq.s32.totalorder %v297, %v174
      %vm368 = vcmp.eq.s32.totalorder %v300, %v174
      %vm369 = vcmp.eq.s32.totalorder %v303, %v174
      %vm370 = vcmp.eq.s32.totalorder %v306, %v174
      %vm371 = vcmp.eq.s32.totalorder %v309, %v174
      %vm372 = vcmp.eq.s32.totalorder %v312, %v174
      %vm373 = vcmp.eq.s32.totalorder %v315, %v174
      %vm374 = vcmp.eq.s32.totalorder %v318, %v174
      %vm375 = vcmp.eq.s32.totalorder %v321, %v174
      %vm376 = vcmp.eq.s32.totalorder %v324, %v174
      %vm377 = vcmp.eq.s32.totalorder %v327, %v174
      %vm378 = vcmp.eq.s32.totalorder %v330, %v174
      %vm379 = vcmp.eq.s32.totalorder %v333, %v174
      %vm380 = vcmp.eq.s32.totalorder %v336, %v174
      %vm381 = vcmp.eq.s32.totalorder %v339, %v174
      %vm382 = vcmp.eq.s32.totalorder %v342, %v174
      %vm383 = vcmp.eq.s32.totalorder %v345, %v174
      %vm384 = vcmp.eq.s32.totalorder %v348, %v174
      %vm385 = vcmp.eq.s32.totalorder %v351, %v174
      %vm386 = vcmp.eq.s32.totalorder %v354, %v174
      %vm387 = vcmp.eq.s32.totalorder %v357, %v174
      %vm388 = vcmp.eq.s32.totalorder %v360, %v174
      %vm389 = vcmp.eq.s32.totalorder %v363, %v174
      %vm390 = vcmp.eq.s32.totalorder %v366, %v174
      %v391 = vsel %vm367, 1.0, 0.0
      %v392 = vsel %vm368, 1.0, 0.0
      %v393 = vsel %vm369, 1.0, 0.0
      %v394 = vsel %vm370, 1.0, 0.0
      %v395 = vsel %vm371, 1.0, 0.0
      %v396 = vsel %vm372, 1.0, 0.0
      %v397 = vsel %vm373, 1.0, 0.0
      %v398 = vsel %vm374, 1.0, 0.0
      %v399 = vsel %vm375, 1.0, 0.0
      %v400 = vsel %vm376, 1.0, 0.0
      %v401 = vsel %vm377, 1.0, 0.0
      %v402 = vsel %vm378, 1.0, 0.0
      %v403 = vsel %vm379, 1.0, 0.0
      %v404 = vsel %vm380, 1.0, 0.0
      %v405 = vsel %vm381, 1.0, 0.0
      %v406 = vsel %vm382, 1.0, 0.0
      %v407 = vsel %vm383, 1.0, 0.0
      %v408 = vsel %vm384, 1.0, 0.0
      %v409 = vsel %vm385, 1.0, 0.0
      %v410 = vsel %vm386, 1.0, 0.0
      %v411 = vsel %vm387, 1.0, 0.0
      %v412 = vsel %vm388, 1.0, 0.0
      %v413 = vsel %vm389, 1.0, 0.0
      %v414 = vsel %vm390, 1.0, 0.0
      %415 = vset.pattern.permute.xlu0 2
      %416 = vperm.xlu0 %415, %v149
      %v417 = vpop.permute.xlu0 %416
      %418 = vset.pattern.permute.xlu0 2
      %419 = vperm.xlu0 %418, %v150
      %v420 = vpop.permute.xlu0 %419
      %421 = vset.pattern.permute.xlu0 2
      %422 = vperm.xlu0 %421, %v151
      %v423 = vpop.permute.xlu0 %422
      %424 = vset.pattern.permute.xlu0 2
      %425 = vperm.xlu0 %424, %v152
      %v426 = vpop.permute.xlu0 %425
      %427 = vset.pattern.permute.xlu0 2
      %428 = vperm.xlu0 %427, %v153
      %v429 = vpop.permute.xlu0 %428
      %430 = vset.pattern.permute.xlu0 2
      %431 = vperm.xlu0 %430, %v154
      %v432 = vpop.permute.xlu0 %431
      %433 = vset.pattern.permute.xlu0 2
      %434 = vperm.xlu0 %433, %v155
      %v435 = vpop.permute.xlu0 %434
      %436 = vset.pattern.permute.xlu0 2
      %437 = vperm.xlu0 %436, %v156
      %v438 = vpop.permute.xlu0 %437
      %439 = vset.pattern.permute.xlu0 2
      %440 = vperm.xlu0 %439, %v157
      %v441 = vpop.permute.xlu0 %440
      %442 = vset.pattern.permute.xlu0 2
      %443 = vperm.xlu0 %442, %v158
      %v444 = vpop.permute.xlu0 %443
      %445 = vset.pattern.permute.xlu0 2
      %446 = vperm.xlu0 %445, %v159
      %v447 = vpop.permute.xlu0 %446
      %448 = vset.pattern.permute.xlu0 2
      %449 = vperm.xlu0 %448, %v160
      %v450 = vpop.permute.xlu0 %449
      %451 = vset.pattern.permute.xlu0 2
      %452 = vperm.xlu0 %451, %v161
      %v453 = vpop.permute.xlu0 %452
      %454 = vset.pattern.permute.xlu0 2
      %455 = vperm.xlu0 %454, %v162
      %v456 = vpop.permute.xlu0 %455
      %457 = vset.pattern.permute.xlu0 2
      %458 = vperm.xlu0 %457, %v163
      %v459 = vpop.permute.xlu0 %458
      %460 = vset.pattern.permute.xlu0 2
      %461 = vperm.xlu0 %460, %v164
      %v462 = vpop.permute.xlu0 %461
      %463 = vset.pattern.permute.xlu0 2
      %464 = vperm.xlu0 %463, %v165
      %v465 = vpop.permute.xlu0 %464
      %466 = vset.pattern.permute.xlu0 2
      %467 = vperm.xlu0 %466, %v166
      %v468 = vpop.permute.xlu0 %467
      %469 = vset.pattern.permute.xlu0 2
      %470 = vperm.xlu0 %469, %v167
      %v471 = vpop.permute.xlu0 %470
      %472 = vset.pattern.permute.xlu0 2
      %473 = vperm.xlu0 %472, %v168
      %v474 = vpop.permute.xlu0 %473
      %475 = vset.pattern.permute.xlu0 2
      %476 = vperm.xlu0 %475, %v169
      %v477 = vpop.permute.xlu0 %476
      %478 = vset.pattern.permute.xlu0 2
      %479 = vperm.xlu0 %478, %v170
      %v480 = vpop.permute.xlu0 %479
      %481 = vset.pattern.permute.xlu0 2
      %482 = vperm.xlu0 %481, %v171
      %v483 = vpop.permute.xlu0 %482
      %484 = vset.pattern.permute.xlu0 2
      %485 = vperm.xlu0 %484, %v172
      %v486 = vpop.permute.xlu0 %485
      %vm487 = vcmp.eq.s32.totalorder %v417, %v174
      %vm488 = vcmp.eq.s32.totalorder %v420, %v174
      %vm489 = vcmp.eq.s32.totalorder %v423, %v174
      %vm490 = vcmp.eq.s32.totalorder %v426, %v174
      %vm491 = vcmp.eq.s32.totalorder %v429, %v174
      %vm492 = vcmp.eq.s32.totalorder %v432, %v174
      %vm493 = vcmp.eq.s32.totalorder %v435, %v174
      %vm494 = vcmp.eq.s32.totalorder %v438, %v174
      %vm495 = vcmp.eq.s32.totalorder %v441, %v174
      %vm496 = vcmp.eq.s32.totalorder %v444, %v174
      %vm497 = vcmp.eq.s32.totalorder %v447, %v174
      %vm498 = vcmp.eq.s32.totalorder %v450, %v174
      %vm499 = vcmp.eq.s32.totalorder %v453, %v174
      %vm500 = vcmp.eq.s32.totalorder %v456, %v174
      %vm501 = vcmp.eq.s32.totalorder %v459, %v174
      %vm502 = vcmp.eq.s32.totalorder %v462, %v174
      %vm503 = vcmp.eq.s32.totalorder %v465, %v174
      %vm504 = vcmp.eq.s32.totalorder %v468, %v174
      %vm505 = vcmp.eq.s32.totalorder %v471, %v174
      %vm506 = vcmp.eq.s32.totalorder %v474, %v174
      %vm507 = vcmp.eq.s32.totalorder %v477, %v174
      %vm508 = vcmp.eq.s32.totalorder %v480, %v174
      %vm509 = vcmp.eq.s32.totalorder %v483, %v174
      %vm510 = vcmp.eq.s32.totalorder %v486, %v174
      %v511 = vsel %vm487, 1.0, 0.0
      %v512 = vsel %vm488, 1.0, 0.0
      %v513 = vsel %vm489, 1.0, 0.0
      %v514 = vsel %vm490, 1.0, 0.0
      %v515 = vsel %vm491, 1.0, 0.0
      %v516 = vsel %vm492, 1.0, 0.0
      %v517 = vsel %vm493, 1.0, 0.0
      %v518 = vsel %vm494, 1.0, 0.0
      %v519 = vsel %vm495, 1.0, 0.0
      %v520 = vsel %vm496, 1.0, 0.0
      %v521 = vsel %vm497, 1.0, 0.0
      %v522 = vsel %vm498, 1.0, 0.0
      %v523 = vsel %vm499, 1.0, 0.0
      %v524 = vsel %vm500, 1.0, 0.0
      %v525 = vsel %vm501, 1.0, 0.0
      %v526 = vsel %vm502, 1.0, 0.0
      %v527 = vsel %vm503, 1.0, 0.0
      %v528 = vsel %vm504, 1.0, 0.0
      %v529 = vsel %vm505, 1.0, 0.0
      %v530 = vsel %vm506, 1.0, 0.0
      %v531 = vsel %vm507, 1.0, 0.0
      %v532 = vsel %vm508, 1.0, 0.0
      %v533 = vsel %vm509, 1.0, 0.0
      %v534 = vsel %vm510, 1.0, 0.0
      %535 = vset.pattern.permute.xlu0 3
      %536 = vperm.xlu0 %535, %v149
      %v537 = vpop.permute.xlu0 %536
      %538 = vset.pattern.permute.xlu0 3
      %539 = vperm.xlu0 %538, %v150
      %v540 = vpop.permute.xlu0 %539
      %541 = vset.pattern.permute.xlu0 3
      %542 = vperm.xlu0 %541, %v151
      %v543 = vpop.permute.xlu0 %542
      %544 = vset.pattern.permute.xlu0 3
      %545 = vperm.xlu0 %544, %v152
      %v546 = vpop.permute.xlu0 %545
      %547 = vset.pattern.permute.xlu0 3
      %548 = vperm.xlu0 %547, %v153
      %v549 = vpop.permute.xlu0 %548
      %550 = vset.pattern.permute.xlu0 3
      %551 = vperm.xlu0 %550, %v154
      %v552 = vpop.permute.xlu0 %551
      %553 = vset.pattern.permute.xlu0 3
      %554 = vperm.xlu0 %553, %v155
      %v555 = vpop.permute.xlu0 %554
      %556 = vset.pattern.permute.xlu0 3
      %557 = vperm.xlu0 %556, %v156
      %v558 = vpop.permute.xlu0 %557
      %559 = vset.pattern.permute.xlu0 3
      %560 = vperm.xlu0 %559, %v157
      %v561 = vpop.permute.xlu0 %560
      %562 = vset.pattern.permute.xlu0 3
      %563 = vperm.xlu0 %562, %v158
      %v564 = vpop.permute.xlu0 %563
      %565 = vset.pattern.permute.xlu0 3
      %566 = vperm.xlu0 %565, %v159
      %v567 = vpop.permute.xlu0 %566
      %568 = vset.pattern.permute.xlu0 3
      %569 = vperm.xlu0 %568, %v160
      %v570 = vpop.permute.xlu0 %569
      %571 = vset.pattern.permute.xlu0 3
      %572 = vperm.xlu0 %571, %v161
      %v573 = vpop.permute.xlu0 %572
      %574 = vset.pattern.permute.xlu0 3
      %575 = vperm.xlu0 %574, %v162
      %v576 = vpop.permute.xlu0 %575
      %577 = vset.pattern.permute.xlu0 3
      %578 = vperm.xlu0 %577, %v163
      %v579 = vpop.permute.xlu0 %578
      %580 = vset.pattern.permute.xlu0 3
      %581 = vperm.xlu0 %580, %v164
      %v582 = vpop.permute.xlu0 %581
      %583 = vset.pattern.permute.xlu0 3
      %584 = vperm.xlu0 %583, %v165
      %v585 = vpop.permute.xlu0 %584
      %586 = vset.pattern.permute.xlu0 3
      %587 = vperm.xlu0 %586, %v166
      %v588 = vpop.permute.xlu0 %587
      %589 = vset.pattern.permute.xlu0 3
      %590 = vperm.xlu0 %589, %v167
      %v591 = vpop.permute.xlu0 %590
      %592 = vset.pattern.permute.xlu0 3
      %593 = vperm.xlu0 %592, %v168
      %v594 = vpop.permute.xlu0 %593
      %595 = vset.pattern.permute.xlu0 3
      %596 = vperm.xlu0 %595, %v169
      %v597 = vpop.permute.xlu0 %596
      %598 = vset.pattern.permute.xlu0 3
      %599 = vperm.xlu0 %598, %v170
      %v600 = vpop.permute.xlu0 %599
      %601 = vset.pattern.permute.xlu0 3
      %602 = vperm.xlu0 %601, %v171
      %v603 = vpop.permute.xlu0 %602
      %604 = vset.pattern.permute.xlu0 3
      %605 = vperm.xlu0 %604, %v172
      %v606 = vpop.permute.xlu0 %605
      %vm607 = vcmp.eq.s32.totalorder %v537, %v174
      %vm608 = vcmp.eq.s32.totalorder %v540, %v174
      %vm609 = vcmp.eq.s32.totalorder %v543, %v174
      %vm610 = vcmp.eq.s32.totalorder %v546, %v174
      %vm611 = vcmp.eq.s32.totalorder %v549, %v174
      %vm612 = vcmp.eq.s32.totalorder %v552, %v174
      %vm613 = vcmp.eq.s32.totalorder %v555, %v174
      %vm614 = vcmp.eq.s32.totalorder %v558, %v174
      %vm615 = vcmp.eq.s32.totalorder %v561, %v174
      %vm616 = vcmp.eq.s32.totalorder %v564, %v174
      %vm617 = vcmp.eq.s32.totalorder %v567, %v174
      %vm618 = vcmp.eq.s32.totalorder %v570, %v174
      %vm619 = vcmp.eq.s32.totalorder %v573, %v174
      %vm620 = vcmp.eq.s32.totalorder %v576, %v174
      %vm621 = vcmp.eq.s32.totalorder %v579, %v174
      %vm622 = vcmp.eq.s32.totalorder %v582, %v174
      %vm623 = vcmp.eq.s32.totalorder %v585, %v174
      %vm624 = vcmp.eq.s32.totalorder %v588, %v174
      %vm625 = vcmp.eq.s32.totalorder %v591, %v174
      %vm626 = vcmp.eq.s32.totalorder %v594, %v174
      %vm627 = vcmp.eq.s32.totalorder %v597, %v174
      %vm628 = vcmp.eq.s32.totalorder %v600, %v174
      %vm629 = vcmp.eq.s32.totalorder %v603, %v174
      %vm630 = vcmp.eq.s32.totalorder %v606, %v174
      %v631 = vsel %vm607, 1.0, 0.0
      %v632 = vsel %vm608, 1.0, 0.0
      %v633 = vsel %vm609, 1.0, 0.0
      %v634 = vsel %vm610, 1.0, 0.0
      %v635 = vsel %vm611, 1.0, 0.0
      %v636 = vsel %vm612, 1.0, 0.0
      %v637 = vsel %vm613, 1.0, 0.0
      %v638 = vsel %vm614, 1.0, 0.0
      %v639 = vsel %vm615, 1.0, 0.0
      %v640 = vsel %vm616, 1.0, 0.0
      %v641 = vsel %vm617, 1.0, 0.0
      %v642 = vsel %vm618, 1.0, 0.0
      %v643 = vsel %vm619, 1.0, 0.0
      %v644 = vsel %vm620, 1.0, 0.0
      %v645 = vsel %vm621, 1.0, 0.0
      %v646 = vsel %vm622, 1.0, 0.0
      %v647 = vsel %vm623, 1.0, 0.0
      %v648 = vsel %vm624, 1.0, 0.0
      %v649 = vsel %vm625, 1.0, 0.0
      %v650 = vsel %vm626, 1.0, 0.0
      %v651 = vsel %vm627, 1.0, 0.0
      %v652 = vsel %vm628, 1.0, 0.0
      %v653 = vsel %vm629, 1.0, 0.0
      %v654 = vsel %vm630, 1.0, 0.0
      %655 = vset.pattern.permute.xlu0 4
      %656 = vperm.xlu0 %655, %v149
      %v657 = vpop.permute.xlu0 %656
      %658 = vset.pattern.permute.xlu0 4
      %659 = vperm.xlu0 %658, %v150
      %v660 = vpop.permute.xlu0 %659
      %661 = vset.pattern.permute.xlu0 4
      %662 = vperm.xlu0 %661, %v151
      %v663 = vpop.permute.xlu0 %662
      %664 = vset.pattern.permute.xlu0 4
      %665 = vperm.xlu0 %664, %v152
      %v666 = vpop.permute.xlu0 %665
      %667 = vset.pattern.permute.xlu0 4
      %668 = vperm.xlu0 %667, %v153
      %v669 = vpop.permute.xlu0 %668
      %670 = vset.pattern.permute.xlu0 4
      %671 = vperm.xlu0 %670, %v154
      %v672 = vpop.permute.xlu0 %671
      %673 = vset.pattern.permute.xlu0 4
      %674 = vperm.xlu0 %673, %v155
      %v675 = vpop.permute.xlu0 %674
      %676 = vset.pattern.permute.xlu0 4
      %677 = vperm.xlu0 %676, %v156
      %v678 = vpop.permute.xlu0 %677
      %679 = vset.pattern.permute.xlu0 4
      %680 = vperm.xlu0 %679, %v157
      %v681 = vpop.permute.xlu0 %680
      %682 = vset.pattern.permute.xlu0 4
      %683 = vperm.xlu0 %682, %v158
      %v684 = vpop.permute.xlu0 %683
      %685 = vset.pattern.permute.xlu0 4
      %686 = vperm.xlu0 %685, %v159
      %v687 = vpop.permute.xlu0 %686
      %688 = vset.pattern.permute.xlu0 4
      %689 = vperm.xlu0 %688, %v160
      %v690 = vpop.permute.xlu0 %689
      %691 = vset.pattern.permute.xlu0 4
      %692 = vperm.xlu0 %691, %v161
      %v693 = vpop.permute.xlu0 %692
      %694 = vset.pattern.permute.xlu0 4
      %695 = vperm.xlu0 %694, %v162
      %v696 = vpop.permute.xlu0 %695
      %697 = vset.pattern.permute.xlu0 4
      %698 = vperm.xlu0 %697, %v163
      %v699 = vpop.permute.xlu0 %698
      %700 = vset.pattern.permute.xlu0 4
      %701 = vperm.xlu0 %700, %v164
      %v702 = vpop.permute.xlu0 %701
      %703 = vset.pattern.permute.xlu0 4
      %704 = vperm.xlu0 %703, %v165
      %v705 = vpop.permute.xlu0 %704
      %706 = vset.pattern.permute.xlu0 4
      %707 = vperm.xlu0 %706, %v166
      %v708 = vpop.permute.xlu0 %707
      %709 = vset.pattern.permute.xlu0 4
      %710 = vperm.xlu0 %709, %v167
      %v711 = vpop.permute.xlu0 %710
      %712 = vset.pattern.permute.xlu0 4
      %713 = vperm.xlu0 %712, %v168
      %v714 = vpop.permute.xlu0 %713
      %715 = vset.pattern.permute.xlu0 4
      %716 = vperm.xlu0 %715, %v169
      %v717 = vpop.permute.xlu0 %716
      %718 = vset.pattern.permute.xlu0 4
      %719 = vperm.xlu0 %718, %v170
      %v720 = vpop.permute.xlu0 %719
      %721 = vset.pattern.permute.xlu0 4
      %722 = vperm.xlu0 %721, %v171
      %v723 = vpop.permute.xlu0 %722
      %724 = vset.pattern.permute.xlu0 4
      %725 = vperm.xlu0 %724, %v172
      %v726 = vpop.permute.xlu0 %725
      %vm727 = vcmp.eq.s32.totalorder %v657, %v174
      %vm728 = vcmp.eq.s32.totalorder %v660, %v174
      %vm729 = vcmp.eq.s32.totalorder %v663, %v174
      %vm730 = vcmp.eq.s32.totalorder %v666, %v174
      %vm731 = vcmp.eq.s32.totalorder %v669, %v174
      %vm732 = vcmp.eq.s32.totalorder %v672, %v174
      %vm733 = vcmp.eq.s32.totalorder %v675, %v174
      %vm734 = vcmp.eq.s32.totalorder %v678, %v174
      %vm735 = vcmp.eq.s32.totalorder %v681, %v174
      %vm736 = vcmp.eq.s32.totalorder %v684, %v174
      %vm737 = vcmp.eq.s32.totalorder %v687, %v174
      %vm738 = vcmp.eq.s32.totalorder %v690, %v174
      %vm739 = vcmp.eq.s32.totalorder %v693, %v174
      %vm740 = vcmp.eq.s32.totalorder %v696, %v174
      %vm741 = vcmp.eq.s32.totalorder %v699, %v174
      %vm742 = vcmp.eq.s32.totalorder %v702, %v174
      %vm743 = vcmp.eq.s32.totalorder %v705, %v174
      %vm744 = vcmp.eq.s32.totalorder %v708, %v174
      %vm745 = vcmp.eq.s32.totalorder %v711, %v174
      %vm746 = vcmp.eq.s32.totalorder %v714, %v174
      %vm747 = vcmp.eq.s32.totalorder %v717, %v174
      %vm748 = vcmp.eq.s32.totalorder %v720, %v174
      %vm749 = vcmp.eq.s32.totalorder %v723, %v174
      %vm750 = vcmp.eq.s32.totalorder %v726, %v174
      %v751 = vsel %vm727, 1.0, 0.0
      %v752 = vsel %vm728, 1.0, 0.0
      %v753 = vsel %vm729, 1.0, 0.0
      %v754 = vsel %vm730, 1.0, 0.0
      %v755 = vsel %vm731, 1.0, 0.0
      %v756 = vsel %vm732, 1.0, 0.0
      %v757 = vsel %vm733, 1.0, 0.0
      %v758 = vsel %vm734, 1.0, 0.0
      %v759 = vsel %vm735, 1.0, 0.0
      %v760 = vsel %vm736, 1.0, 0.0
      %v761 = vsel %vm737, 1.0, 0.0
      %v762 = vsel %vm738, 1.0, 0.0
      %v763 = vsel %vm739, 1.0, 0.0
      %v764 = vsel %vm740, 1.0, 0.0
      %v765 = vsel %vm741, 1.0, 0.0
      %v766 = vsel %vm742, 1.0, 0.0
      %v767 = vsel %vm743, 1.0, 0.0
      %v768 = vsel %vm744, 1.0, 0.0
      %v769 = vsel %vm745, 1.0, 0.0
      %v770 = vsel %vm746, 1.0, 0.0
      %v771 = vsel %vm747, 1.0, 0.0
      %v772 = vsel %vm748, 1.0, 0.0
      %v773 = vsel %vm749, 1.0, 0.0
      %v774 = vsel %vm750, 1.0, 0.0
      %775 = vset.pattern.permute.xlu0 5
      %776 = vperm.xlu0 %775, %v149
      %v777 = vpop.permute.xlu0 %776
      %778 = vset.pattern.permute.xlu0 5
      %779 = vperm.xlu0 %778, %v150
      %v780 = vpop.permute.xlu0 %779
      %781 = vset.pattern.permute.xlu0 5
      %782 = vperm.xlu0 %781, %v151
      %v783 = vpop.permute.xlu0 %782
      %784 = vset.pattern.permute.xlu0 5
      %785 = vperm.xlu0 %784, %v152
      %v786 = vpop.permute.xlu0 %785
      %787 = vset.pattern.permute.xlu0 5
      %788 = vperm.xlu0 %787, %v153
      %v789 = vpop.permute.xlu0 %788
      %790 = vset.pattern.permute.xlu0 5
      %791 = vperm.xlu0 %790, %v154
      %v792 = vpop.permute.xlu0 %791
      %793 = vset.pattern.permute.xlu0 5
      %794 = vperm.xlu0 %793, %v155
      %v795 = vpop.permute.xlu0 %794
      %796 = vset.pattern.permute.xlu0 5
      %797 = vperm.xlu0 %796, %v156
      %v798 = vpop.permute.xlu0 %797
      %799 = vset.pattern.permute.xlu0 5
      %800 = vperm.xlu0 %799, %v157
      %v801 = vpop.permute.xlu0 %800
      %802 = vset.pattern.permute.xlu0 5
      %803 = vperm.xlu0 %802, %v158
      %v804 = vpop.permute.xlu0 %803
      %805 = vset.pattern.permute.xlu0 5
      %806 = vperm.xlu0 %805, %v159
      %v807 = vpop.permute.xlu0 %806
      %808 = vset.pattern.permute.xlu0 5
      %809 = vperm.xlu0 %808, %v160
      %v810 = vpop.permute.xlu0 %809
      %811 = vset.pattern.permute.xlu0 5
      %812 = vperm.xlu0 %811, %v161
      %v813 = vpop.permute.xlu0 %812
      %814 = vset.pattern.permute.xlu0 5
      %815 = vperm.xlu0 %814, %v162
      %v816 = vpop.permute.xlu0 %815
      %817 = vset.pattern.permute.xlu0 5
      %818 = vperm.xlu0 %817, %v163
      %v819 = vpop.permute.xlu0 %818
      %820 = vset.pattern.permute.xlu0 5
      %821 = vperm.xlu0 %820, %v164
      %v822 = vpop.permute.xlu0 %821
      %823 = vset.pattern.permute.xlu0 5
      %824 = vperm.xlu0 %823, %v165
      %v825 = vpop.permute.xlu0 %824
      %826 = vset.pattern.permute.xlu0 5
      %827 = vperm.xlu0 %826, %v166
      %v828 = vpop.permute.xlu0 %827
      %829 = vset.pattern.permute.xlu0 5
      %830 = vperm.xlu0 %829, %v167
      %v831 = vpop.permute.xlu0 %830
      %832 = vset.pattern.permute.xlu0 5
      %833 = vperm.xlu0 %832, %v168
      %v834 = vpop.permute.xlu0 %833
      %835 = vset.pattern.permute.xlu0 5
      %836 = vperm.xlu0 %835, %v169
      %v837 = vpop.permute.xlu0 %836
      %838 = vset.pattern.permute.xlu0 5
      %839 = vperm.xlu0 %838, %v170
      %v840 = vpop.permute.xlu0 %839
      %841 = vset.pattern.permute.xlu0 5
      %842 = vperm.xlu0 %841, %v171
      %v843 = vpop.permute.xlu0 %842
      %844 = vset.pattern.permute.xlu0 5
      %845 = vperm.xlu0 %844, %v172
      %v846 = vpop.permute.xlu0 %845
      %vm847 = vcmp.eq.s32.totalorder %v777, %v174
      %vm848 = vcmp.eq.s32.totalorder %v780, %v174
      %vm849 = vcmp.eq.s32.totalorder %v783, %v174
      %vm850 = vcmp.eq.s32.totalorder %v786, %v174
      %vm851 = vcmp.eq.s32.totalorder %v789, %v174
      %vm852 = vcmp.eq.s32.totalorder %v792, %v174
      %vm853 = vcmp.eq.s32.totalorder %v795, %v174
      %vm854 = vcmp.eq.s32.totalorder %v798, %v174
      %vm855 = vcmp.eq.s32.totalorder %v801, %v174
      %vm856 = vcmp.eq.s32.totalorder %v804, %v174
      %vm857 = vcmp.eq.s32.totalorder %v807, %v174
      %vm858 = vcmp.eq.s32.totalorder %v810, %v174
      %vm859 = vcmp.eq.s32.totalorder %v813, %v174
      %vm860 = vcmp.eq.s32.totalorder %v816, %v174
      %vm861 = vcmp.eq.s32.totalorder %v819, %v174
      %vm862 = vcmp.eq.s32.totalorder %v822, %v174
      %vm863 = vcmp.eq.s32.totalorder %v825, %v174
      %vm864 = vcmp.eq.s32.totalorder %v828, %v174
      %vm865 = vcmp.eq.s32.totalorder %v831, %v174
      %vm866 = vcmp.eq.s32.totalorder %v834, %v174
      %vm867 = vcmp.eq.s32.totalorder %v837, %v174
      %vm868 = vcmp.eq.s32.totalorder %v840, %v174
      %vm869 = vcmp.eq.s32.totalorder %v843, %v174
      %vm870 = vcmp.eq.s32.totalorder %v846, %v174
      %v871 = vsel %vm847, 1.0, 0.0
      %v872 = vsel %vm848, 1.0, 0.0
      %v873 = vsel %vm849, 1.0, 0.0
      %v874 = vsel %vm850, 1.0, 0.0
      %v875 = vsel %vm851, 1.0, 0.0
      %v876 = vsel %vm852, 1.0, 0.0
      %v877 = vsel %vm853, 1.0, 0.0
      %v878 = vsel %vm854, 1.0, 0.0
      %v879 = vsel %vm855, 1.0, 0.0
      %v880 = vsel %vm856, 1.0, 0.0
      %v881 = vsel %vm857, 1.0, 0.0
      %v882 = vsel %vm858, 1.0, 0.0
      %v883 = vsel %vm859, 1.0, 0.0
      %v884 = vsel %vm860, 1.0, 0.0
      %v885 = vsel %vm861, 1.0, 0.0
      %v886 = vsel %vm862, 1.0, 0.0
      %v887 = vsel %vm863, 1.0, 0.0
      %v888 = vsel %vm864, 1.0, 0.0
      %v889 = vsel %vm865, 1.0, 0.0
      %v890 = vsel %vm866, 1.0, 0.0
      %v891 = vsel %vm867, 1.0, 0.0
      %v892 = vsel %vm868, 1.0, 0.0
      %v893 = vsel %vm869, 1.0, 0.0
      %v894 = vsel %vm870, 1.0, 0.0
      %895 = vset.pattern.permute.xlu0 6
      %896 = vperm.xlu0 %895, %v149
      %v897 = vpop.permute.xlu0 %896
      %898 = vset.pattern.permute.xlu0 6
      %899 = vperm.xlu0 %898, %v150
      %v900 = vpop.permute.xlu0 %899
      %901 = vset.pattern.permute.xlu0 6
      %902 = vperm.xlu0 %901, %v151
      %v903 = vpop.permute.xlu0 %902
      %904 = vset.pattern.permute.xlu0 6
      %905 = vperm.xlu0 %904, %v152
      %v906 = vpop.permute.xlu0 %905
      %907 = vset.pattern.permute.xlu0 6
      %908 = vperm.xlu0 %907, %v153
      %v909 = vpop.permute.xlu0 %908
      %910 = vset.pattern.permute.xlu0 6
      %911 = vperm.xlu0 %910, %v154
      %v912 = vpop.permute.xlu0 %911
      %913 = vset.pattern.permute.xlu0 6
      %914 = vperm.xlu0 %913, %v155
      %v915 = vpop.permute.xlu0 %914
      %916 = vset.pattern.permute.xlu0 6
      %917 = vperm.xlu0 %916, %v156
      %v918 = vpop.permute.xlu0 %917
      %919 = vset.pattern.permute.xlu0 6
      %920 = vperm.xlu0 %919, %v157
      %v921 = vpop.permute.xlu0 %920
      %922 = vset.pattern.permute.xlu0 6
      %923 = vperm.xlu0 %922, %v158
      %v924 = vpop.permute.xlu0 %923
      %925 = vset.pattern.permute.xlu0 6
      %926 = vperm.xlu0 %925, %v159
      %v927 = vpop.permute.xlu0 %926
      %928 = vset.pattern.permute.xlu0 6
      %929 = vperm.xlu0 %928, %v160
      %v930 = vpop.permute.xlu0 %929
      %931 = vset.pattern.permute.xlu0 6
      %932 = vperm.xlu0 %931, %v161
      %v933 = vpop.permute.xlu0 %932
      %934 = vset.pattern.permute.xlu0 6
      %935 = vperm.xlu0 %934, %v162
      %v936 = vpop.permute.xlu0 %935
      %937 = vset.pattern.permute.xlu0 6
      %938 = vperm.xlu0 %937, %v163
      %v939 = vpop.permute.xlu0 %938
      %940 = vset.pattern.permute.xlu0 6
      %941 = vperm.xlu0 %940, %v164
      %v942 = vpop.permute.xlu0 %941
      %943 = vset.pattern.permute.xlu0 6
      %944 = vperm.xlu0 %943, %v165
      %v945 = vpop.permute.xlu0 %944
      %946 = vset.pattern.permute.xlu0 6
      %947 = vperm.xlu0 %946, %v166
      %v948 = vpop.permute.xlu0 %947
      %949 = vset.pattern.permute.xlu0 6
      %950 = vperm.xlu0 %949, %v167
      %v951 = vpop.permute.xlu0 %950
      %952 = vset.pattern.permute.xlu0 6
      %953 = vperm.xlu0 %952, %v168
      %v954 = vpop.permute.xlu0 %953
      %955 = vset.pattern.permute.xlu0 6
      %956 = vperm.xlu0 %955, %v169
      %v957 = vpop.permute.xlu0 %956
      %958 = vset.pattern.permute.xlu0 6
      %959 = vperm.xlu0 %958, %v170
      %v960 = vpop.permute.xlu0 %959
      %961 = vset.pattern.permute.xlu0 6
      %962 = vperm.xlu0 %961, %v171
      %v963 = vpop.permute.xlu0 %962
      %964 = vset.pattern.permute.xlu0 6
      %965 = vperm.xlu0 %964, %v172
      %v966 = vpop.permute.xlu0 %965
      %vm967 = vcmp.eq.s32.totalorder %v897, %v174
      %vm968 = vcmp.eq.s32.totalorder %v900, %v174
      %vm969 = vcmp.eq.s32.totalorder %v903, %v174
      %vm970 = vcmp.eq.s32.totalorder %v906, %v174
      %vm971 = vcmp.eq.s32.totalorder %v909, %v174
      %vm972 = vcmp.eq.s32.totalorder %v912, %v174
      %vm973 = vcmp.eq.s32.totalorder %v915, %v174
      %vm974 = vcmp.eq.s32.totalorder %v918, %v174
      %vm975 = vcmp.eq.s32.totalorder %v921, %v174
      %vm976 = vcmp.eq.s32.totalorder %v924, %v174
      %vm977 = vcmp.eq.s32.totalorder %v927, %v174
      %vm978 = vcmp.eq.s32.totalorder %v930, %v174
      %vm979 = vcmp.eq.s32.totalorder %v933, %v174
      %vm980 = vcmp.eq.s32.totalorder %v936, %v174
      %vm981 = vcmp.eq.s32.totalorder %v939, %v174
      %vm982 = vcmp.eq.s32.totalorder %v942, %v174
      %vm983 = vcmp.eq.s32.totalorder %v945, %v174
      %vm984 = vcmp.eq.s32.totalorder %v948, %v174
      %vm985 = vcmp.eq.s32.totalorder %v951, %v174
      %vm986 = vcmp.eq.s32.totalorder %v954, %v174
      %vm987 = vcmp.eq.s32.totalorder %v957, %v174
      %vm988 = vcmp.eq.s32.totalorder %v960, %v174
      %vm989 = vcmp.eq.s32.totalorder %v963, %v174
      %vm990 = vcmp.eq.s32.totalorder %v966, %v174
      %v991 = vsel %vm967, 1.0, 0.0
      %v992 = vsel %vm968, 1.0, 0.0
      %v993 = vsel %vm969, 1.0, 0.0
      %v994 = vsel %vm970, 1.0, 0.0
      %v995 = vsel %vm971, 1.0, 0.0
      %v996 = vsel %vm972, 1.0, 0.0
      %v997 = vsel %vm973, 1.0, 0.0
      %v998 = vsel %vm974, 1.0, 0.0
      %v999 = vsel %vm975, 1.0, 0.0
      %v1000 = vsel %vm976, 1.0, 0.0
      %v1001 = vsel %vm977, 1.0, 0.0
      %v1002 = vsel %vm978, 1.0, 0.0
      %v1003 = vsel %vm979, 1.0, 0.0
      %v1004 = vsel %vm980, 1.0, 0.0
      %v1005 = vsel %vm981, 1.0, 0.0
      %v1006 = vsel %vm982, 1.0, 0.0
      %v1007 = vsel %vm983, 1.0, 0.0
      %v1008 = vsel %vm984, 1.0, 0.0
      %v1009 = vsel %vm985, 1.0, 0.0
      %v1010 = vsel %vm986, 1.0, 0.0
      %v1011 = vsel %vm987, 1.0, 0.0
      %v1012 = vsel %vm988, 1.0, 0.0
      %v1013 = vsel %vm989, 1.0, 0.0
      %v1014 = vsel %vm990, 1.0, 0.0
      %1015 = vset.pattern.permute.xlu0 7
      %1016 = vperm.xlu0 %1015, %v149
      %v1017 = vpop.permute.xlu0 %1016
      %1018 = vset.pattern.permute.xlu0 7
      %1019 = vperm.xlu0 %1018, %v150
      %v1020 = vpop.permute.xlu0 %1019
      %1021 = vset.pattern.permute.xlu0 7
      %1022 = vperm.xlu0 %1021, %v151
      %v1023 = vpop.permute.xlu0 %1022
      %1024 = vset.pattern.permute.xlu0 7
      %1025 = vperm.xlu0 %1024, %v152
      %v1026 = vpop.permute.xlu0 %1025
      %1027 = vset.pattern.permute.xlu0 7
      %1028 = vperm.xlu0 %1027, %v153
      %v1029 = vpop.permute.xlu0 %1028
      %1030 = vset.pattern.permute.xlu0 7
      %1031 = vperm.xlu0 %1030, %v154
      %v1032 = vpop.permute.xlu0 %1031
      %1033 = vset.pattern.permute.xlu0 7
      %1034 = vperm.xlu0 %1033, %v155
      %v1035 = vpop.permute.xlu0 %1034
      %1036 = vset.pattern.permute.xlu0 7
      %1037 = vperm.xlu0 %1036, %v156
      %v1038 = vpop.permute.xlu0 %1037
      %1039 = vset.pattern.permute.xlu0 7
      %1040 = vperm.xlu0 %1039, %v157
      %v1041 = vpop.permute.xlu0 %1040
      %1042 = vset.pattern.permute.xlu0 7
      %1043 = vperm.xlu0 %1042, %v158
      %v1044 = vpop.permute.xlu0 %1043
      %1045 = vset.pattern.permute.xlu0 7
      %1046 = vperm.xlu0 %1045, %v159
      %v1047 = vpop.permute.xlu0 %1046
      %1048 = vset.pattern.permute.xlu0 7
      %1049 = vperm.xlu0 %1048, %v160
      %v1050 = vpop.permute.xlu0 %1049
      %1051 = vset.pattern.permute.xlu0 7
      %1052 = vperm.xlu0 %1051, %v161
      %v1053 = vpop.permute.xlu0 %1052
      %1054 = vset.pattern.permute.xlu0 7
      %1055 = vperm.xlu0 %1054, %v162
      %v1056 = vpop.permute.xlu0 %1055
      %1057 = vset.pattern.permute.xlu0 7
      %1058 = vperm.xlu0 %1057, %v163
      %v1059 = vpop.permute.xlu0 %1058
      %1060 = vset.pattern.permute.xlu0 7
      %1061 = vperm.xlu0 %1060, %v164
      %v1062 = vpop.permute.xlu0 %1061
      %1063 = vset.pattern.permute.xlu0 7
      %1064 = vperm.xlu0 %1063, %v165
      %v1065 = vpop.permute.xlu0 %1064
      %1066 = vset.pattern.permute.xlu0 7
      %1067 = vperm.xlu0 %1066, %v166
      %v1068 = vpop.permute.xlu0 %1067
      %1069 = vset.pattern.permute.xlu0 7
      %1070 = vperm.xlu0 %1069, %v167
      %v1071 = vpop.permute.xlu0 %1070
      %1072 = vset.pattern.permute.xlu0 7
      %1073 = vperm.xlu0 %1072, %v168
      %v1074 = vpop.permute.xlu0 %1073
      %1075 = vset.pattern.permute.xlu0 7
      %1076 = vperm.xlu0 %1075, %v169
      %v1077 = vpop.permute.xlu0 %1076
      %1078 = vset.pattern.permute.xlu0 7
      %1079 = vperm.xlu0 %1078, %v170
      %v1080 = vpop.permute.xlu0 %1079
      %1081 = vset.pattern.permute.xlu0 7
      %1082 = vperm.xlu0 %1081, %v171
      %v1083 = vpop.permute.xlu0 %1082
      %1084 = vset.pattern.permute.xlu0 7
      %1085 = vperm.xlu0 %1084, %v172
      %v1086 = vpop.permute.xlu0 %1085
      %vm1087 = vcmp.eq.s32.totalorder %v1017, %v174
      %vm1088 = vcmp.eq.s32.totalorder %v1020, %v174
      %vm1089 = vcmp.eq.s32.totalorder %v1023, %v174
      %vm1090 = vcmp.eq.s32.totalorder %v1026, %v174
      %vm1091 = vcmp.eq.s32.totalorder %v1029, %v174
      %vm1092 = vcmp.eq.s32.totalorder %v1032, %v174
      %vm1093 = vcmp.eq.s32.totalorder %v1035, %v174
      %vm1094 = vcmp.eq.s32.totalorder %v1038, %v174
      %vm1095 = vcmp.eq.s32.totalorder %v1041, %v174
      %vm1096 = vcmp.eq.s32.totalorder %v1044, %v174
      %vm1097 = vcmp.eq.s32.totalorder %v1047, %v174
      %vm1098 = vcmp.eq.s32.totalorder %v1050, %v174
      %vm1099 = vcmp.eq.s32.totalorder %v1053, %v174
      %vm1100 = vcmp.eq.s32.totalorder %v1056, %v174
      %vm1101 = vcmp.eq.s32.totalorder %v1059, %v174
      %vm1102 = vcmp.eq.s32.totalorder %v1062, %v174
      %vm1103 = vcmp.eq.s32.totalorder %v1065, %v174
      %vm1104 = vcmp.eq.s32.totalorder %v1068, %v174
      %vm1105 = vcmp.eq.s32.totalorder %v1071, %v174
      %vm1106 = vcmp.eq.s32.totalorder %v1074, %v174
      %vm1107 = vcmp.eq.s32.totalorder %v1077, %v174
      %vm1108 = vcmp.eq.s32.totalorder %v1080, %v174
      %vm1109 = vcmp.eq.s32.totalorder %v1083, %v174
      %vm1110 = vcmp.eq.s32.totalorder %v1086, %v174
      %v1111 = vsel %vm1087, 1.0, 0.0
      %v1112 = vsel %vm1088, 1.0, 0.0
      %v1113 = vsel %vm1089, 1.0, 0.0
      %v1114 = vsel %vm1090, 1.0, 0.0
      %v1115 = vsel %vm1091, 1.0, 0.0
      %v1116 = vsel %vm1092, 1.0, 0.0
      %v1117 = vsel %vm1093, 1.0, 0.0
      %v1118 = vsel %vm1094, 1.0, 0.0
      %v1119 = vsel %vm1095, 1.0, 0.0
      %v1120 = vsel %vm1096, 1.0, 0.0
      %v1121 = vsel %vm1097, 1.0, 0.0
      %v1122 = vsel %vm1098, 1.0, 0.0
      %v1123 = vsel %vm1099, 1.0, 0.0
      %v1124 = vsel %vm1100, 1.0, 0.0
      %v1125 = vsel %vm1101, 1.0, 0.0
      %v1126 = vsel %vm1102, 1.0, 0.0
      %v1127 = vsel %vm1103, 1.0, 0.0
      %v1128 = vsel %vm1104, 1.0, 0.0
      %v1129 = vsel %vm1105, 1.0, 0.0
      %v1130 = vsel %vm1106, 1.0, 0.0
      %v1131 = vsel %vm1107, 1.0, 0.0
      %v1132 = vsel %vm1108, 1.0, 0.0
      %v1133 = vsel %vm1109, 1.0, 0.0
      %v1134 = vsel %vm1110, 1.0, 0.0
      %1135 = vset.pattern.permute.xlu0 8
      %1136 = vperm.xlu0 %1135, %v149
      %v1137 = vpop.permute.xlu0 %1136
      %1138 = vset.pattern.permute.xlu0 8
      %1139 = vperm.xlu0 %1138, %v150
      %v1140 = vpop.permute.xlu0 %1139
      %1141 = vset.pattern.permute.xlu0 8
      %1142 = vperm.xlu0 %1141, %v151
      %v1143 = vpop.permute.xlu0 %1142
      %1144 = vset.pattern.permute.xlu0 8
      %1145 = vperm.xlu0 %1144, %v152
      %v1146 = vpop.permute.xlu0 %1145
      %1147 = vset.pattern.permute.xlu0 8
      %1148 = vperm.xlu0 %1147, %v153
      %v1149 = vpop.permute.xlu0 %1148
      %1150 = vset.pattern.permute.xlu0 8
      %1151 = vperm.xlu0 %1150, %v154
      %v1152 = vpop.permute.xlu0 %1151
      %1153 = vset.pattern.permute.xlu0 8
      %1154 = vperm.xlu0 %1153, %v155
      %v1155 = vpop.permute.xlu0 %1154
      %1156 = vset.pattern.permute.xlu0 8
      %1157 = vperm.xlu0 %1156, %v156
      %v1158 = vpop.permute.xlu0 %1157
      %1159 = vset.pattern.permute.xlu0 8
      %1160 = vperm.xlu0 %1159, %v157
      %v1161 = vpop.permute.xlu0 %1160
      %1162 = vset.pattern.permute.xlu0 8
      %1163 = vperm.xlu0 %1162, %v158
      %v1164 = vpop.permute.xlu0 %1163
      %1165 = vset.pattern.permute.xlu0 8
      %1166 = vperm.xlu0 %1165, %v159
      %v1167 = vpop.permute.xlu0 %1166
      %1168 = vset.pattern.permute.xlu0 8
      %1169 = vperm.xlu0 %1168, %v160
      %v1170 = vpop.permute.xlu0 %1169
      %1171 = vset.pattern.permute.xlu0 8
      %1172 = vperm.xlu0 %1171, %v161
      %v1173 = vpop.permute.xlu0 %1172
      %1174 = vset.pattern.permute.xlu0 8
      %1175 = vperm.xlu0 %1174, %v162
      %v1176 = vpop.permute.xlu0 %1175
      %1177 = vset.pattern.permute.xlu0 8
      %1178 = vperm.xlu0 %1177, %v163
      %v1179 = vpop.permute.xlu0 %1178
      %1180 = vset.pattern.permute.xlu0 8
      %1181 = vperm.xlu0 %1180, %v164
      %v1182 = vpop.permute.xlu0 %1181
      %1183 = vset.pattern.permute.xlu0 8
      %1184 = vperm.xlu0 %1183, %v165
      %v1185 = vpop.permute.xlu0 %1184
      %1186 = vset.pattern.permute.xlu0 8
      %1187 = vperm.xlu0 %1186, %v166
      %v1188 = vpop.permute.xlu0 %1187
      %1189 = vset.pattern.permute.xlu0 8
      %1190 = vperm.xlu0 %1189, %v167
      %v1191 = vpop.permute.xlu0 %1190
      %1192 = vset.pattern.permute.xlu0 8
      %1193 = vperm.xlu0 %1192, %v168
      %v1194 = vpop.permute.xlu0 %1193
      %1195 = vset.pattern.permute.xlu0 8
      %1196 = vperm.xlu0 %1195, %v169
      %v1197 = vpop.permute.xlu0 %1196
      %1198 = vset.pattern.permute.xlu0 8
      %1199 = vperm.xlu0 %1198, %v170
      %v1200 = vpop.permute.xlu0 %1199
      %1201 = vset.pattern.permute.xlu0 8
      %1202 = vperm.xlu0 %1201, %v171
      %v1203 = vpop.permute.xlu0 %1202
      %1204 = vset.pattern.permute.xlu0 8
      %1205 = vperm.xlu0 %1204, %v172
      %v1206 = vpop.permute.xlu0 %1205
      %vm1207 = vcmp.eq.s32.totalorder %v1137, %v174
      %vm1208 = vcmp.eq.s32.totalorder %v1140, %v174
      %vm1209 = vcmp.eq.s32.totalorder %v1143, %v174
      %vm1210 = vcmp.eq.s32.totalorder %v1146, %v174
      %vm1211 = vcmp.eq.s32.totalorder %v1149, %v174
      %vm1212 = vcmp.eq.s32.totalorder %v1152, %v174
      %vm1213 = vcmp.eq.s32.totalorder %v1155, %v174
      %vm1214 = vcmp.eq.s32.totalorder %v1158, %v174
      %vm1215 = vcmp.eq.s32.totalorder %v1161, %v174
      %vm1216 = vcmp.eq.s32.totalorder %v1164, %v174
      %vm1217 = vcmp.eq.s32.totalorder %v1167, %v174
      %vm1218 = vcmp.eq.s32.totalorder %v1170, %v174
      %vm1219 = vcmp.eq.s32.totalorder %v1173, %v174
      %vm1220 = vcmp.eq.s32.totalorder %v1176, %v174
      %vm1221 = vcmp.eq.s32.totalorder %v1179, %v174
      %vm1222 = vcmp.eq.s32.totalorder %v1182, %v174
      %vm1223 = vcmp.eq.s32.totalorder %v1185, %v174
      %vm1224 = vcmp.eq.s32.totalorder %v1188, %v174
      %vm1225 = vcmp.eq.s32.totalorder %v1191, %v174
      %vm1226 = vcmp.eq.s32.totalorder %v1194, %v174
      %vm1227 = vcmp.eq.s32.totalorder %v1197, %v174
      %vm1228 = vcmp.eq.s32.totalorder %v1200, %v174
      %vm1229 = vcmp.eq.s32.totalorder %v1203, %v174
      %vm1230 = vcmp.eq.s32.totalorder %v1206, %v174
      %v1231 = vsel %vm1207, 1.0, 0.0
      %v1232 = vsel %vm1208, 1.0, 0.0
      %v1233 = vsel %vm1209, 1.0, 0.0
      %v1234 = vsel %vm1210, 1.0, 0.0
      %v1235 = vsel %vm1211, 1.0, 0.0
      %v1236 = vsel %vm1212, 1.0, 0.0
      %v1237 = vsel %vm1213, 1.0, 0.0
      %v1238 = vsel %vm1214, 1.0, 0.0
      %v1239 = vsel %vm1215, 1.0, 0.0
      %v1240 = vsel %vm1216, 1.0, 0.0
      %v1241 = vsel %vm1217, 1.0, 0.0
      %v1242 = vsel %vm1218, 1.0, 0.0
      %v1243 = vsel %vm1219, 1.0, 0.0
      %v1244 = vsel %vm1220, 1.0, 0.0
      %v1245 = vsel %vm1221, 1.0, 0.0
      %v1246 = vsel %vm1222, 1.0, 0.0
      %v1247 = vsel %vm1223, 1.0, 0.0
      %v1248 = vsel %vm1224, 1.0, 0.0
      %v1249 = vsel %vm1225, 1.0, 0.0
      %v1250 = vsel %vm1226, 1.0, 0.0
      %v1251 = vsel %vm1227, 1.0, 0.0
      %v1252 = vsel %vm1228, 1.0, 0.0
      %v1253 = vsel %vm1229, 1.0, 0.0
      %v1254 = vsel %vm1230, 1.0, 0.0
      %1255 = vset.pattern.permute.xlu0 9
      %1256 = vperm.xlu0 %1255, %v149
      %v1257 = vpop.permute.xlu0 %1256
      %1258 = vset.pattern.permute.xlu0 9
      %1259 = vperm.xlu0 %1258, %v150
      %v1260 = vpop.permute.xlu0 %1259
      %1261 = vset.pattern.permute.xlu0 9
      %1262 = vperm.xlu0 %1261, %v151
      %v1263 = vpop.permute.xlu0 %1262
      %1264 = vset.pattern.permute.xlu0 9
      %1265 = vperm.xlu0 %1264, %v152
      %v1266 = vpop.permute.xlu0 %1265
      %1267 = vset.pattern.permute.xlu0 9
      %1268 = vperm.xlu0 %1267, %v153
      %v1269 = vpop.permute.xlu0 %1268
      %1270 = vset.pattern.permute.xlu0 9
      %1271 = vperm.xlu0 %1270, %v154
      %v1272 = vpop.permute.xlu0 %1271
      %1273 = vset.pattern.permute.xlu0 9
      %1274 = vperm.xlu0 %1273, %v155
      %v1275 = vpop.permute.xlu0 %1274
      %1276 = vset.pattern.permute.xlu0 9
      %1277 = vperm.xlu0 %1276, %v156
      %v1278 = vpop.permute.xlu0 %1277
      %1279 = vset.pattern.permute.xlu0 9
      %1280 = vperm.xlu0 %1279, %v157
      %v1281 = vpop.permute.xlu0 %1280
      %1282 = vset.pattern.permute.xlu0 9
      %1283 = vperm.xlu0 %1282, %v158
      %v1284 = vpop.permute.xlu0 %1283
      %1285 = vset.pattern.permute.xlu0 9
      %1286 = vperm.xlu0 %1285, %v159
      %v1287 = vpop.permute.xlu0 %1286
      %1288 = vset.pattern.permute.xlu0 9
      %1289 = vperm.xlu0 %1288, %v160
      %v1290 = vpop.permute.xlu0 %1289
      %1291 = vset.pattern.permute.xlu0 9
      %1292 = vperm.xlu0 %1291, %v161
      %v1293 = vpop.permute.xlu0 %1292
      %1294 = vset.pattern.permute.xlu0 9
      %1295 = vperm.xlu0 %1294, %v162
      %v1296 = vpop.permute.xlu0 %1295
      %1297 = vset.pattern.permute.xlu0 9
      %1298 = vperm.xlu0 %1297, %v163
      %v1299 = vpop.permute.xlu0 %1298
      %1300 = vset.pattern.permute.xlu0 9
      %1301 = vperm.xlu0 %1300, %v164
      %v1302 = vpop.permute.xlu0 %1301
      %1303 = vset.pattern.permute.xlu0 9
      %1304 = vperm.xlu0 %1303, %v165
      %v1305 = vpop.permute.xlu0 %1304
      %1306 = vset.pattern.permute.xlu0 9
      %1307 = vperm.xlu0 %1306, %v166
      %v1308 = vpop.permute.xlu0 %1307
      %1309 = vset.pattern.permute.xlu0 9
      %1310 = vperm.xlu0 %1309, %v167
      %v1311 = vpop.permute.xlu0 %1310
      %1312 = vset.pattern.permute.xlu0 9
      %1313 = vperm.xlu0 %1312, %v168
      %v1314 = vpop.permute.xlu0 %1313
      %1315 = vset.pattern.permute.xlu0 9
      %1316 = vperm.xlu0 %1315, %v169
      %v1317 = vpop.permute.xlu0 %1316
      %1318 = vset.pattern.permute.xlu0 9
      %1319 = vperm.xlu0 %1318, %v170
      %v1320 = vpop.permute.xlu0 %1319
      %1321 = vset.pattern.permute.xlu0 9
      %1322 = vperm.xlu0 %1321, %v171
      %v1323 = vpop.permute.xlu0 %1322
      %1324 = vset.pattern.permute.xlu0 9
      %1325 = vperm.xlu0 %1324, %v172
      %v1326 = vpop.permute.xlu0 %1325
      %vm1327 = vcmp.eq.s32.totalorder %v1257, %v174
      %vm1328 = vcmp.eq.s32.totalorder %v1260, %v174
      %vm1329 = vcmp.eq.s32.totalorder %v1263, %v174
      %vm1330 = vcmp.eq.s32.totalorder %v1266, %v174
      %vm1331 = vcmp.eq.s32.totalorder %v1269, %v174
      %vm1332 = vcmp.eq.s32.totalorder %v1272, %v174
      %vm1333 = vcmp.eq.s32.totalorder %v1275, %v174
      %vm1334 = vcmp.eq.s32.totalorder %v1278, %v174
      %vm1335 = vcmp.eq.s32.totalorder %v1281, %v174
      %vm1336 = vcmp.eq.s32.totalorder %v1284, %v174
      %vm1337 = vcmp.eq.s32.totalorder %v1287, %v174
      %vm1338 = vcmp.eq.s32.totalorder %v1290, %v174
      %vm1339 = vcmp.eq.s32.totalorder %v1293, %v174
      %vm1340 = vcmp.eq.s32.totalorder %v1296, %v174
      %vm1341 = vcmp.eq.s32.totalorder %v1299, %v174
      %vm1342 = vcmp.eq.s32.totalorder %v1302, %v174
      %vm1343 = vcmp.eq.s32.totalorder %v1305, %v174
      %vm1344 = vcmp.eq.s32.totalorder %v1308, %v174
      %vm1345 = vcmp.eq.s32.totalorder %v1311, %v174
      %vm1346 = vcmp.eq.s32.totalorder %v1314, %v174
      %vm1347 = vcmp.eq.s32.totalorder %v1317, %v174
      %vm1348 = vcmp.eq.s32.totalorder %v1320, %v174
      %vm1349 = vcmp.eq.s32.totalorder %v1323, %v174
      %vm1350 = vcmp.eq.s32.totalorder %v1326, %v174
      %v1351 = vsel %vm1327, 1.0, 0.0
      %v1352 = vsel %vm1328, 1.0, 0.0
      %v1353 = vsel %vm1329, 1.0, 0.0
      %v1354 = vsel %vm1330, 1.0, 0.0
      %v1355 = vsel %vm1331, 1.0, 0.0
      %v1356 = vsel %vm1332, 1.0, 0.0
      %v1357 = vsel %vm1333, 1.0, 0.0
      %v1358 = vsel %vm1334, 1.0, 0.0
      %v1359 = vsel %vm1335, 1.0, 0.0
      %v1360 = vsel %vm1336, 1.0, 0.0
      %v1361 = vsel %vm1337, 1.0, 0.0
      %v1362 = vsel %vm1338, 1.0, 0.0
      %v1363 = vsel %vm1339, 1.0, 0.0
      %v1364 = vsel %vm1340, 1.0, 0.0
      %v1365 = vsel %vm1341, 1.0, 0.0
      %v1366 = vsel %vm1342, 1.0, 0.0
      %v1367 = vsel %vm1343, 1.0, 0.0
      %v1368 = vsel %vm1344, 1.0, 0.0
      %v1369 = vsel %vm1345, 1.0, 0.0
      %v1370 = vsel %vm1346, 1.0, 0.0
      %v1371 = vsel %vm1347, 1.0, 0.0
      %v1372 = vsel %vm1348, 1.0, 0.0
      %v1373 = vsel %vm1349, 1.0, 0.0
      %v1374 = vsel %vm1350, 1.0, 0.0
      %1375 = vset.pattern.permute.xlu0 10
      %1376 = vperm.xlu0 %1375, %v149
      %v1377 = vpop.permute.xlu0 %1376
      %1378 = vset.pattern.permute.xlu0 10
      %1379 = vperm.xlu0 %1378, %v150
      %v1380 = vpop.permute.xlu0 %1379
      %1381 = vset.pattern.permute.xlu0 10
      %1382 = vperm.xlu0 %1381, %v151
      %v1383 = vpop.permute.xlu0 %1382
      %1384 = vset.pattern.permute.xlu0 10
      %1385 = vperm.xlu0 %1384, %v152
      %v1386 = vpop.permute.xlu0 %1385
      %1387 = vset.pattern.permute.xlu0 10
      %1388 = vperm.xlu0 %1387, %v153
      %v1389 = vpop.permute.xlu0 %1388
      %1390 = vset.pattern.permute.xlu0 10
      %1391 = vperm.xlu0 %1390, %v154
      %v1392 = vpop.permute.xlu0 %1391
      %1393 = vset.pattern.permute.xlu0 10
      %1394 = vperm.xlu0 %1393, %v155
      %v1395 = vpop.permute.xlu0 %1394
      %1396 = vset.pattern.permute.xlu0 10
      %1397 = vperm.xlu0 %1396, %v156
      %v1398 = vpop.permute.xlu0 %1397
      %1399 = vset.pattern.permute.xlu0 10
      %1400 = vperm.xlu0 %1399, %v157
      %v1401 = vpop.permute.xlu0 %1400
      %1402 = vset.pattern.permute.xlu0 10
      %1403 = vperm.xlu0 %1402, %v158
      %v1404 = vpop.permute.xlu0 %1403
      %1405 = vset.pattern.permute.xlu0 10
      %1406 = vperm.xlu0 %1405, %v159
      %v1407 = vpop.permute.xlu0 %1406
      %1408 = vset.pattern.permute.xlu0 10
      %1409 = vperm.xlu0 %1408, %v160
      %v1410 = vpop.permute.xlu0 %1409
      %1411 = vset.pattern.permute.xlu0 10
      %1412 = vperm.xlu0 %1411, %v161
      %v1413 = vpop.permute.xlu0 %1412
      %1414 = vset.pattern.permute.xlu0 10
      %1415 = vperm.xlu0 %1414, %v162
      %v1416 = vpop.permute.xlu0 %1415
      %1417 = vset.pattern.permute.xlu0 10
      %1418 = vperm.xlu0 %1417, %v163
      %v1419 = vpop.permute.xlu0 %1418
      %1420 = vset.pattern.permute.xlu0 10
      %1421 = vperm.xlu0 %1420, %v164
      %v1422 = vpop.permute.xlu0 %1421
      %1423 = vset.pattern.permute.xlu0 10
      %1424 = vperm.xlu0 %1423, %v165
      %v1425 = vpop.permute.xlu0 %1424
      %1426 = vset.pattern.permute.xlu0 10
      %1427 = vperm.xlu0 %1426, %v166
      %v1428 = vpop.permute.xlu0 %1427
      %1429 = vset.pattern.permute.xlu0 10
      %1430 = vperm.xlu0 %1429, %v167
      %v1431 = vpop.permute.xlu0 %1430
      %1432 = vset.pattern.permute.xlu0 10
      %1433 = vperm.xlu0 %1432, %v168
      %v1434 = vpop.permute.xlu0 %1433
      %1435 = vset.pattern.permute.xlu0 10
      %1436 = vperm.xlu0 %1435, %v169
      %v1437 = vpop.permute.xlu0 %1436
      %1438 = vset.pattern.permute.xlu0 10
      %1439 = vperm.xlu0 %1438, %v170
      %v1440 = vpop.permute.xlu0 %1439
      %1441 = vset.pattern.permute.xlu0 10
      %1442 = vperm.xlu0 %1441, %v171
      %v1443 = vpop.permute.xlu0 %1442
      %1444 = vset.pattern.permute.xlu0 10
      %1445 = vperm.xlu0 %1444, %v172
      %v1446 = vpop.permute.xlu0 %1445
      %vm1447 = vcmp.eq.s32.totalorder %v1377, %v174
      %vm1448 = vcmp.eq.s32.totalorder %v1380, %v174
      %vm1449 = vcmp.eq.s32.totalorder %v1383, %v174
      %vm1450 = vcmp.eq.s32.totalorder %v1386, %v174
      %vm1451 = vcmp.eq.s32.totalorder %v1389, %v174
      %vm1452 = vcmp.eq.s32.totalorder %v1392, %v174
      %vm1453 = vcmp.eq.s32.totalorder %v1395, %v174
      %vm1454 = vcmp.eq.s32.totalorder %v1398, %v174
      %vm1455 = vcmp.eq.s32.totalorder %v1401, %v174
      %vm1456 = vcmp.eq.s32.totalorder %v1404, %v174
      %vm1457 = vcmp.eq.s32.totalorder %v1407, %v174
      %vm1458 = vcmp.eq.s32.totalorder %v1410, %v174
      %vm1459 = vcmp.eq.s32.totalorder %v1413, %v174
      %vm1460 = vcmp.eq.s32.totalorder %v1416, %v174
      %vm1461 = vcmp.eq.s32.totalorder %v1419, %v174
      %vm1462 = vcmp.eq.s32.totalorder %v1422, %v174
      %vm1463 = vcmp.eq.s32.totalorder %v1425, %v174
      %vm1464 = vcmp.eq.s32.totalorder %v1428, %v174
      %vm1465 = vcmp.eq.s32.totalorder %v1431, %v174
      %vm1466 = vcmp.eq.s32.totalorder %v1434, %v174
      %vm1467 = vcmp.eq.s32.totalorder %v1437, %v174
      %vm1468 = vcmp.eq.s32.totalorder %v1440, %v174
      %vm1469 = vcmp.eq.s32.totalorder %v1443, %v174
      %vm1470 = vcmp.eq.s32.totalorder %v1446, %v174
      %v1471 = vsel %vm1447, 1.0, 0.0
      %v1472 = vsel %vm1448, 1.0, 0.0
      %v1473 = vsel %vm1449, 1.0, 0.0
      %v1474 = vsel %vm1450, 1.0, 0.0
      %v1475 = vsel %vm1451, 1.0, 0.0
      %v1476 = vsel %vm1452, 1.0, 0.0
      %v1477 = vsel %vm1453, 1.0, 0.0
      %v1478 = vsel %vm1454, 1.0, 0.0
      %v1479 = vsel %vm1455, 1.0, 0.0
      %v1480 = vsel %vm1456, 1.0, 0.0
      %v1481 = vsel %vm1457, 1.0, 0.0
      %v1482 = vsel %vm1458, 1.0, 0.0
      %v1483 = vsel %vm1459, 1.0, 0.0
      %v1484 = vsel %vm1460, 1.0, 0.0
      %v1485 = vsel %vm1461, 1.0, 0.0
      %v1486 = vsel %vm1462, 1.0, 0.0
      %v1487 = vsel %vm1463, 1.0, 0.0
      %v1488 = vsel %vm1464, 1.0, 0.0
      %v1489 = vsel %vm1465, 1.0, 0.0
      %v1490 = vsel %vm1466, 1.0, 0.0
      %v1491 = vsel %vm1467, 1.0, 0.0
      %v1492 = vsel %vm1468, 1.0, 0.0
      %v1493 = vsel %vm1469, 1.0, 0.0
      %v1494 = vsel %vm1470, 1.0, 0.0
      %1495 = vset.pattern.permute.xlu0 11
      %1496 = vperm.xlu0 %1495, %v149
      %v1497 = vpop.permute.xlu0 %1496
      %1498 = vset.pattern.permute.xlu0 11
      %1499 = vperm.xlu0 %1498, %v150
      %v1500 = vpop.permute.xlu0 %1499
      %1501 = vset.pattern.permute.xlu0 11
      %1502 = vperm.xlu0 %1501, %v151
      %v1503 = vpop.permute.xlu0 %1502
      %1504 = vset.pattern.permute.xlu0 11
      %1505 = vperm.xlu0 %1504, %v152
      %v1506 = vpop.permute.xlu0 %1505
      %1507 = vset.pattern.permute.xlu0 11
      %1508 = vperm.xlu0 %1507, %v153
      %v1509 = vpop.permute.xlu0 %1508
      %1510 = vset.pattern.permute.xlu0 11
      %1511 = vperm.xlu0 %1510, %v154
      %v1512 = vpop.permute.xlu0 %1511
      %1513 = vset.pattern.permute.xlu0 11
      %1514 = vperm.xlu0 %1513, %v155
      %v1515 = vpop.permute.xlu0 %1514
      %1516 = vset.pattern.permute.xlu0 11
      %1517 = vperm.xlu0 %1516, %v156
      %v1518 = vpop.permute.xlu0 %1517
      %1519 = vset.pattern.permute.xlu0 11
      %1520 = vperm.xlu0 %1519, %v157
      %v1521 = vpop.permute.xlu0 %1520
      %1522 = vset.pattern.permute.xlu0 11
      %1523 = vperm.xlu0 %1522, %v158
      %v1524 = vpop.permute.xlu0 %1523
      %1525 = vset.pattern.permute.xlu0 11
      %1526 = vperm.xlu0 %1525, %v159
      %v1527 = vpop.permute.xlu0 %1526
      %1528 = vset.pattern.permute.xlu0 11
      %1529 = vperm.xlu0 %1528, %v160
      %v1530 = vpop.permute.xlu0 %1529
      %1531 = vset.pattern.permute.xlu0 11
      %1532 = vperm.xlu0 %1531, %v161
      %v1533 = vpop.permute.xlu0 %1532
      %1534 = vset.pattern.permute.xlu0 11
      %1535 = vperm.xlu0 %1534, %v162
      %v1536 = vpop.permute.xlu0 %1535
      %1537 = vset.pattern.permute.xlu0 11
      %1538 = vperm.xlu0 %1537, %v163
      %v1539 = vpop.permute.xlu0 %1538
      %1540 = vset.pattern.permute.xlu0 11
      %1541 = vperm.xlu0 %1540, %v164
      %v1542 = vpop.permute.xlu0 %1541
      %1543 = vset.pattern.permute.xlu0 11
      %1544 = vperm.xlu0 %1543, %v165
      %v1545 = vpop.permute.xlu0 %1544
      %1546 = vset.pattern.permute.xlu0 11
      %1547 = vperm.xlu0 %1546, %v166
      %v1548 = vpop.permute.xlu0 %1547
      %1549 = vset.pattern.permute.xlu0 11
      %1550 = vperm.xlu0 %1549, %v167
      %v1551 = vpop.permute.xlu0 %1550
      %1552 = vset.pattern.permute.xlu0 11
      %1553 = vperm.xlu0 %1552, %v168
      %v1554 = vpop.permute.xlu0 %1553
      %1555 = vset.pattern.permute.xlu0 11
      %1556 = vperm.xlu0 %1555, %v169
      %v1557 = vpop.permute.xlu0 %1556
      %1558 = vset.pattern.permute.xlu0 11
      %1559 = vperm.xlu0 %1558, %v170
      %v1560 = vpop.permute.xlu0 %1559
      %1561 = vset.pattern.permute.xlu0 11
      %1562 = vperm.xlu0 %1561, %v171
      %v1563 = vpop.permute.xlu0 %1562
      %1564 = vset.pattern.permute.xlu0 11
      %1565 = vperm.xlu0 %1564, %v172
      %v1566 = vpop.permute.xlu0 %1565
      %vm1567 = vcmp.eq.s32.totalorder %v1497, %v174
      %vm1568 = vcmp.eq.s32.totalorder %v1500, %v174
      %vm1569 = vcmp.eq.s32.totalorder %v1503, %v174
      %vm1570 = vcmp.eq.s32.totalorder %v1506, %v174
      %vm1571 = vcmp.eq.s32.totalorder %v1509, %v174
      %vm1572 = vcmp.eq.s32.totalorder %v1512, %v174
      %vm1573 = vcmp.eq.s32.totalorder %v1515, %v174
      %vm1574 = vcmp.eq.s32.totalorder %v1518, %v174
      %vm1575 = vcmp.eq.s32.totalorder %v1521, %v174
      %vm1576 = vcmp.eq.s32.totalorder %v1524, %v174
      %vm1577 = vcmp.eq.s32.totalorder %v1527, %v174
      %vm1578 = vcmp.eq.s32.totalorder %v1530, %v174
      %vm1579 = vcmp.eq.s32.totalorder %v1533, %v174
      %vm1580 = vcmp.eq.s32.totalorder %v1536, %v174
      %vm1581 = vcmp.eq.s32.totalorder %v1539, %v174
      %vm1582 = vcmp.eq.s32.totalorder %v1542, %v174
      %vm1583 = vcmp.eq.s32.totalorder %v1545, %v174
      %vm1584 = vcmp.eq.s32.totalorder %v1548, %v174
      %vm1585 = vcmp.eq.s32.totalorder %v1551, %v174
      %vm1586 = vcmp.eq.s32.totalorder %v1554, %v174
      %vm1587 = vcmp.eq.s32.totalorder %v1557, %v174
      %vm1588 = vcmp.eq.s32.totalorder %v1560, %v174
      %vm1589 = vcmp.eq.s32.totalorder %v1563, %v174
      %vm1590 = vcmp.eq.s32.totalorder %v1566, %v174
      %v1591 = vsel %vm1567, 1.0, 0.0
      %v1592 = vsel %vm1568, 1.0, 0.0
      %v1593 = vsel %vm1569, 1.0, 0.0
      %v1594 = vsel %vm1570, 1.0, 0.0
      %v1595 = vsel %vm1571, 1.0, 0.0
      %v1596 = vsel %vm1572, 1.0, 0.0
      %v1597 = vsel %vm1573, 1.0, 0.0
      %v1598 = vsel %vm1574, 1.0, 0.0
      %v1599 = vsel %vm1575, 1.0, 0.0
      %v1600 = vsel %vm1576, 1.0, 0.0
      %v1601 = vsel %vm1577, 1.0, 0.0
      %v1602 = vsel %vm1578, 1.0, 0.0
      %v1603 = vsel %vm1579, 1.0, 0.0
      %v1604 = vsel %vm1580, 1.0, 0.0
      %v1605 = vsel %vm1581, 1.0, 0.0
      %v1606 = vsel %vm1582, 1.0, 0.0
      %v1607 = vsel %vm1583, 1.0, 0.0
      %v1608 = vsel %vm1584, 1.0, 0.0
      %v1609 = vsel %vm1585, 1.0, 0.0
      %v1610 = vsel %vm1586, 1.0, 0.0
      %v1611 = vsel %vm1587, 1.0, 0.0
      %v1612 = vsel %vm1588, 1.0, 0.0
      %v1613 = vsel %vm1589, 1.0, 0.0
      %v1614 = vsel %vm1590, 1.0, 0.0
      %v1615 = vadd.f32 %v271, %v391
      %v1616 = vadd.f32 %v272, %v392
      %v1617 = vadd.f32 %v273, %v393
      %v1618 = vadd.f32 %v274, %v394
      %v1619 = vadd.f32 %v275, %v395
      %v1620 = vadd.f32 %v276, %v396
      %v1621 = vadd.f32 %v277, %v397
      %v1622 = vadd.f32 %v278, %v398
      %v1623 = vadd.f32 %v279, %v399
      %v1624 = vadd.f32 %v280, %v400
      %v1625 = vadd.f32 %v281, %v401
      %v1626 = vadd.f32 %v282, %v402
      %v1627 = vadd.f32 %v283, %v403
      %v1628 = vadd.f32 %v284, %v404
      %v1629 = vadd.f32 %v285, %v405
      %v1630 = vadd.f32 %v286, %v406
      %v1631 = vadd.f32 %v287, %v407
      %v1632 = vadd.f32 %v288, %v408
      %v1633 = vadd.f32 %v289, %v409
      %v1634 = vadd.f32 %v290, %v410
      %v1635 = vadd.f32 %v291, %v411
      %v1636 = vadd.f32 %v292, %v412
      %v1637 = vadd.f32 %v293, %v413
      %v1638 = vadd.f32 %v294, %v414
      %v1639 = vadd.f32 %v511, %v631
      %v1640 = vadd.f32 %v512, %v632
      %v1641 = vadd.f32 %v513, %v633
      %v1642 = vadd.f32 %v514, %v634
      %v1643 = vadd.f32 %v515, %v635
      %v1644 = vadd.f32 %v516, %v636
      %v1645 = vadd.f32 %v517, %v637
      %v1646 = vadd.f32 %v518, %v638
      %v1647 = vadd.f32 %v519, %v639
      %v1648 = vadd.f32 %v520, %v640
      %v1649 = vadd.f32 %v521, %v641
      %v1650 = vadd.f32 %v522, %v642
      %v1651 = vadd.f32 %v523, %v643
      %v1652 = vadd.f32 %v524, %v644
      %v1653 = vadd.f32 %v525, %v645
      %v1654 = vadd.f32 %v526, %v646
      %v1655 = vadd.f32 %v527, %v647
      %v1656 = vadd.f32 %v528, %v648
      %v1657 = vadd.f32 %v529, %v649
      %v1658 = vadd.f32 %v530, %v650
      %v1659 = vadd.f32 %v531, %v651
      %v1660 = vadd.f32 %v532, %v652
      %v1661 = vadd.f32 %v533, %v653
      %v1662 = vadd.f32 %v534, %v654
      %v1663 = vadd.f32 %v751, %v871
      %v1664 = vadd.f32 %v752, %v872
      %v1665 = vadd.f32 %v753, %v873
      %v1666 = vadd.f32 %v754, %v874
      %v1667 = vadd.f32 %v755, %v875
      %v1668 = vadd.f32 %v756, %v876
      %v1669 = vadd.f32 %v757, %v877
      %v1670 = vadd.f32 %v758, %v878
      %v1671 = vadd.f32 %v759, %v879
      %v1672 = vadd.f32 %v760, %v880
      %v1673 = vadd.f32 %v761, %v881
      %v1674 = vadd.f32 %v762, %v882
      %v1675 = vadd.f32 %v763, %v883
      %v1676 = vadd.f32 %v764, %v884
      %v1677 = vadd.f32 %v765, %v885
      %v1678 = vadd.f32 %v766, %v886
      %v1679 = vadd.f32 %v767, %v887
      %v1680 = vadd.f32 %v768, %v888
      %v1681 = vadd.f32 %v769, %v889
      %v1682 = vadd.f32 %v770, %v890
      %v1683 = vadd.f32 %v771, %v891
      %v1684 = vadd.f32 %v772, %v892
      %v1685 = vadd.f32 %v773, %v893
      %v1686 = vadd.f32 %v774, %v894
      %v1687 = vadd.f32 %v991, %v1111
      %v1688 = vadd.f32 %v992, %v1112
      %v1689 = vadd.f32 %v993, %v1113
      %v1690 = vadd.f32 %v994, %v1114
      %v1691 = vadd.f32 %v995, %v1115
      %v1692 = vadd.f32 %v996, %v1116
      %v1693 = vadd.f32 %v997, %v1117
      %v1694 = vadd.f32 %v998, %v1118
      %v1695 = vadd.f32 %v999, %v1119
      %v1696 = vadd.f32 %v1000, %v1120
      %v1697 = vadd.f32 %v1001, %v1121
      %v1698 = vadd.f32 %v1002, %v1122
      %v1699 = vadd.f32 %v1003, %v1123
      %v1700 = vadd.f32 %v1004, %v1124
      %v1701 = vadd.f32 %v1005, %v1125
      %v1702 = vadd.f32 %v1006, %v1126
      %v1703 = vadd.f32 %v1007, %v1127
      %v1704 = vadd.f32 %v1008, %v1128
      %v1705 = vadd.f32 %v1009, %v1129
      %v1706 = vadd.f32 %v1010, %v1130
      %v1707 = vadd.f32 %v1011, %v1131
      %v1708 = vadd.f32 %v1012, %v1132
      %v1709 = vadd.f32 %v1013, %v1133
      %v1710 = vadd.f32 %v1014, %v1134
      %v1711 = vadd.f32 %v1231, %v1351
      %v1712 = vadd.f32 %v1232, %v1352
      %v1713 = vadd.f32 %v1233, %v1353
      %v1714 = vadd.f32 %v1234, %v1354
      %v1715 = vadd.f32 %v1235, %v1355
      %v1716 = vadd.f32 %v1236, %v1356
      %v1717 = vadd.f32 %v1237, %v1357
      %v1718 = vadd.f32 %v1238, %v1358
      %v1719 = vadd.f32 %v1239, %v1359
      %v1720 = vadd.f32 %v1240, %v1360
      %v1721 = vadd.f32 %v1241, %v1361
      %v1722 = vadd.f32 %v1242, %v1362
      %v1723 = vadd.f32 %v1243, %v1363
      %v1724 = vadd.f32 %v1244, %v1364
      %v1725 = vadd.f32 %v1245, %v1365
      %v1726 = vadd.f32 %v1246, %v1366
      %v1727 = vadd.f32 %v1247, %v1367
      %v1728 = vadd.f32 %v1248, %v1368
      %v1729 = vadd.f32 %v1249, %v1369
      %v1730 = vadd.f32 %v1250, %v1370
      %v1731 = vadd.f32 %v1251, %v1371
      %v1732 = vadd.f32 %v1252, %v1372
      %v1733 = vadd.f32 %v1253, %v1373
      %v1734 = vadd.f32 %v1254, %v1374
      %v1735 = vadd.f32 %v1471, %v1591
      %v1736 = vadd.f32 %v1472, %v1592
      %v1737 = vadd.f32 %v1473, %v1593
      %v1738 = vadd.f32 %v1474, %v1594
      %v1739 = vadd.f32 %v1475, %v1595
      %v1740 = vadd.f32 %v1476, %v1596
      %v1741 = vadd.f32 %v1477, %v1597
      %v1742 = vadd.f32 %v1478, %v1598
      %v1743 = vadd.f32 %v1479, %v1599
      %v1744 = vadd.f32 %v1480, %v1600
      %v1745 = vadd.f32 %v1481, %v1601
      %v1746 = vadd.f32 %v1482, %v1602
      %v1747 = vadd.f32 %v1483, %v1603
      %v1748 = vadd.f32 %v1484, %v1604
      %v1749 = vadd.f32 %v1485, %v1605
      %v1750 = vadd.f32 %v1486, %v1606
      %v1751 = vadd.f32 %v1487, %v1607
      %v1752 = vadd.f32 %v1488, %v1608
      %v1753 = vadd.f32 %v1489, %v1609
      %v1754 = vadd.f32 %v1490, %v1610
      %v1755 = vadd.f32 %v1491, %v1611
      %v1756 = vadd.f32 %v1492, %v1612
      %v1757 = vadd.f32 %v1493, %v1613
      %v1758 = vadd.f32 %v1494, %v1614
      %v1759 = vadd.f32 %v1615, %v1639
      %v1760 = vadd.f32 %v1616, %v1640
      %v1761 = vadd.f32 %v1617, %v1641
      %v1762 = vadd.f32 %v1618, %v1642
      %v1763 = vadd.f32 %v1619, %v1643
      %v1764 = vadd.f32 %v1620, %v1644
      %v1765 = vadd.f32 %v1621, %v1645
      %v1766 = vadd.f32 %v1622, %v1646
      %v1767 = vadd.f32 %v1623, %v1647
      %v1768 = vadd.f32 %v1624, %v1648
      %v1769 = vadd.f32 %v1625, %v1649
      %v1770 = vadd.f32 %v1626, %v1650
      %v1771 = vadd.f32 %v1627, %v1651
      %v1772 = vadd.f32 %v1628, %v1652
      %v1773 = vadd.f32 %v1629, %v1653
      %v1774 = vadd.f32 %v1630, %v1654
      %v1775 = vadd.f32 %v1631, %v1655
      %v1776 = vadd.f32 %v1632, %v1656
      %v1777 = vadd.f32 %v1633, %v1657
      %v1778 = vadd.f32 %v1634, %v1658
      %v1779 = vadd.f32 %v1635, %v1659
      %v1780 = vadd.f32 %v1636, %v1660
      %v1781 = vadd.f32 %v1637, %v1661
      %v1782 = vadd.f32 %v1638, %v1662
      %v1783 = vadd.f32 %v1663, %v1687
      %v1784 = vadd.f32 %v1664, %v1688
      %v1785 = vadd.f32 %v1665, %v1689
      %v1786 = vadd.f32 %v1666, %v1690
      %v1787 = vadd.f32 %v1667, %v1691
      %v1788 = vadd.f32 %v1668, %v1692
      %v1789 = vadd.f32 %v1669, %v1693
      %v1790 = vadd.f32 %v1670, %v1694
      %v1791 = vadd.f32 %v1671, %v1695
      %v1792 = vadd.f32 %v1672, %v1696
      %v1793 = vadd.f32 %v1673, %v1697
      %v1794 = vadd.f32 %v1674, %v1698
      %v1795 = vadd.f32 %v1675, %v1699
      %v1796 = vadd.f32 %v1676, %v1700
      %v1797 = vadd.f32 %v1677, %v1701
      %v1798 = vadd.f32 %v1678, %v1702
      %v1799 = vadd.f32 %v1679, %v1703
      %v1800 = vadd.f32 %v1680, %v1704
      %v1801 = vadd.f32 %v1681, %v1705
      %v1802 = vadd.f32 %v1682, %v1706
      %v1803 = vadd.f32 %v1683, %v1707
      %v1804 = vadd.f32 %v1684, %v1708
      %v1805 = vadd.f32 %v1685, %v1709
      %v1806 = vadd.f32 %v1686, %v1710
      %v1807 = vadd.f32 %v1711, %v1735
      %v1808 = vadd.f32 %v1712, %v1736
      %v1809 = vadd.f32 %v1713, %v1737
      %v1810 = vadd.f32 %v1714, %v1738
      %v1811 = vadd.f32 %v1715, %v1739
      %v1812 = vadd.f32 %v1716, %v1740
      %v1813 = vadd.f32 %v1717, %v1741
      %v1814 = vadd.f32 %v1718, %v1742
      %v1815 = vadd.f32 %v1719, %v1743
      %v1816 = vadd.f32 %v1720, %v1744
      %v1817 = vadd.f32 %v1721, %v1745
      %v1818 = vadd.f32 %v1722, %v1746
      %v1819 = vadd.f32 %v1723, %v1747
      %v1820 = vadd.f32 %v1724, %v1748
      %v1821 = vadd.f32 %v1725, %v1749
      %v1822 = vadd.f32 %v1726, %v1750
      %v1823 = vadd.f32 %v1727, %v1751
      %v1824 = vadd.f32 %v1728, %v1752
      %v1825 = vadd.f32 %v1729, %v1753
      %v1826 = vadd.f32 %v1730, %v1754
      %v1827 = vadd.f32 %v1731, %v1755
      %v1828 = vadd.f32 %v1732, %v1756
      %v1829 = vadd.f32 %v1733, %v1757
      %v1830 = vadd.f32 %v1734, %v1758
      %v1831 = vadd.f32 %v1759, %v1783
      %v1832 = vadd.f32 %v1760, %v1784
      %v1833 = vadd.f32 %v1761, %v1785
      %v1834 = vadd.f32 %v1762, %v1786
      %v1835 = vadd.f32 %v1763, %v1787
      %v1836 = vadd.f32 %v1764, %v1788
      %v1837 = vadd.f32 %v1765, %v1789
      %v1838 = vadd.f32 %v1766, %v1790
      %v1839 = vadd.f32 %v1767, %v1791
      %v1840 = vadd.f32 %v1768, %v1792
      %v1841 = vadd.f32 %v1769, %v1793
      %v1842 = vadd.f32 %v1770, %v1794
      %v1843 = vadd.f32 %v1771, %v1795
      %v1844 = vadd.f32 %v1772, %v1796
      %v1845 = vadd.f32 %v1773, %v1797
      %v1846 = vadd.f32 %v1774, %v1798
      %v1847 = vadd.f32 %v1775, %v1799
      %v1848 = vadd.f32 %v1776, %v1800
      %v1849 = vadd.f32 %v1777, %v1801
      %v1850 = vadd.f32 %v1778, %v1802
      %v1851 = vadd.f32 %v1779, %v1803
      %v1852 = vadd.f32 %v1780, %v1804
      %v1853 = vadd.f32 %v1781, %v1805
      %v1854 = vadd.f32 %v1782, %v1806
      %v1855 = vadd.f32 %v1831, %v1807
      %v1856 = vadd.f32 %v1832, %v1808
      %v1857 = vadd.f32 %v1833, %v1809
      %v1858 = vadd.f32 %v1834, %v1810
      %v1859 = vadd.f32 %v1835, %v1811
      %v1860 = vadd.f32 %v1836, %v1812
      %v1861 = vadd.f32 %v1837, %v1813
      %v1862 = vadd.f32 %v1838, %v1814
      %v1863 = vadd.f32 %v1839, %v1815
      %v1864 = vadd.f32 %v1840, %v1816
      %v1865 = vadd.f32 %v1841, %v1817
      %v1866 = vadd.f32 %v1842, %v1818
      %v1867 = vadd.f32 %v1843, %v1819
      %v1868 = vadd.f32 %v1844, %v1820
      %v1869 = vadd.f32 %v1845, %v1821
      %v1870 = vadd.f32 %v1846, %v1822
      %v1871 = vadd.f32 %v1847, %v1823
      %v1872 = vadd.f32 %v1848, %v1824
      %v1873 = vadd.f32 %v1849, %v1825
      %v1874 = vadd.f32 %v1850, %v1826
      %v1875 = vadd.f32 %v1851, %v1827
      %v1876 = vadd.f32 %v1852, %v1828
      %v1877 = vadd.f32 %v1853, %v1829
      %v1878 = vadd.f32 %v1854, %v1830
      %1879 = vset.pattern.permute.xlu0 12
      %1880 = vperm.xlu0 %1879, %v149
      %v1881 = vpop.permute.xlu0 %1880
      %1882 = vset.pattern.permute.xlu0 12
      %1883 = vperm.xlu0 %1882, %v150
      %v1884 = vpop.permute.xlu0 %1883
      %1885 = vset.pattern.permute.xlu0 12
      %1886 = vperm.xlu0 %1885, %v151
      %v1887 = vpop.permute.xlu0 %1886
      %1888 = vset.pattern.permute.xlu0 12
      %1889 = vperm.xlu0 %1888, %v152
      %v1890 = vpop.permute.xlu0 %1889
      %1891 = vset.pattern.permute.xlu0 12
      %1892 = vperm.xlu0 %1891, %v153
      %v1893 = vpop.permute.xlu0 %1892
      %1894 = vset.pattern.permute.xlu0 12
      %1895 = vperm.xlu0 %1894, %v154
      %v1896 = vpop.permute.xlu0 %1895
      %1897 = vset.pattern.permute.xlu0 12
      %1898 = vperm.xlu0 %1897, %v155
      %v1899 = vpop.permute.xlu0 %1898
      %1900 = vset.pattern.permute.xlu0 12
      %1901 = vperm.xlu0 %1900, %v156
      %v1902 = vpop.permute.xlu0 %1901
      %1903 = vset.pattern.permute.xlu0 12
      %1904 = vperm.xlu0 %1903, %v157
      %v1905 = vpop.permute.xlu0 %1904
      %1906 = vset.pattern.permute.xlu0 12
      %1907 = vperm.xlu0 %1906, %v158
      %v1908 = vpop.permute.xlu0 %1907
      %1909 = vset.pattern.permute.xlu0 12
      %1910 = vperm.xlu0 %1909, %v159
      %v1911 = vpop.permute.xlu0 %1910
      %1912 = vset.pattern.permute.xlu0 12
      %1913 = vperm.xlu0 %1912, %v160
      %v1914 = vpop.permute.xlu0 %1913
      %1915 = vset.pattern.permute.xlu0 12
      %1916 = vperm.xlu0 %1915, %v161
      %v1917 = vpop.permute.xlu0 %1916
      %1918 = vset.pattern.permute.xlu0 12
      %1919 = vperm.xlu0 %1918, %v162
      %v1920 = vpop.permute.xlu0 %1919
      %1921 = vset.pattern.permute.xlu0 12
      %1922 = vperm.xlu0 %1921, %v163
      %v1923 = vpop.permute.xlu0 %1922
      %1924 = vset.pattern.permute.xlu0 12
      %1925 = vperm.xlu0 %1924, %v164
      %v1926 = vpop.permute.xlu0 %1925
      %1927 = vset.pattern.permute.xlu0 12
      %1928 = vperm.xlu0 %1927, %v165
      %v1929 = vpop.permute.xlu0 %1928
      %1930 = vset.pattern.permute.xlu0 12
      %1931 = vperm.xlu0 %1930, %v166
      %v1932 = vpop.permute.xlu0 %1931
      %1933 = vset.pattern.permute.xlu0 12
      %1934 = vperm.xlu0 %1933, %v167
      %v1935 = vpop.permute.xlu0 %1934
      %1936 = vset.pattern.permute.xlu0 12
      %1937 = vperm.xlu0 %1936, %v168
      %v1938 = vpop.permute.xlu0 %1937
      %1939 = vset.pattern.permute.xlu0 12
      %1940 = vperm.xlu0 %1939, %v169
      %v1941 = vpop.permute.xlu0 %1940
      %1942 = vset.pattern.permute.xlu0 12
      %1943 = vperm.xlu0 %1942, %v170
      %v1944 = vpop.permute.xlu0 %1943
      %1945 = vset.pattern.permute.xlu0 12
      %1946 = vperm.xlu0 %1945, %v171
      %v1947 = vpop.permute.xlu0 %1946
      %1948 = vset.pattern.permute.xlu0 12
      %1949 = vperm.xlu0 %1948, %v172
      %v1950 = vpop.permute.xlu0 %1949
      %vm1951 = vcmp.eq.s32.totalorder %v1881, %v174
      %vm1952 = vcmp.eq.s32.totalorder %v1884, %v174
      %vm1953 = vcmp.eq.s32.totalorder %v1887, %v174
      %vm1954 = vcmp.eq.s32.totalorder %v1890, %v174
      %vm1955 = vcmp.eq.s32.totalorder %v1893, %v174
      %vm1956 = vcmp.eq.s32.totalorder %v1896, %v174
      %vm1957 = vcmp.eq.s32.totalorder %v1899, %v174
      %vm1958 = vcmp.eq.s32.totalorder %v1902, %v174
      %vm1959 = vcmp.eq.s32.totalorder %v1905, %v174
      %vm1960 = vcmp.eq.s32.totalorder %v1908, %v174
      %vm1961 = vcmp.eq.s32.totalorder %v1911, %v174
      %vm1962 = vcmp.eq.s32.totalorder %v1914, %v174
      %vm1963 = vcmp.eq.s32.totalorder %v1917, %v174
      %vm1964 = vcmp.eq.s32.totalorder %v1920, %v174
      %vm1965 = vcmp.eq.s32.totalorder %v1923, %v174
      %vm1966 = vcmp.eq.s32.totalorder %v1926, %v174
      %vm1967 = vcmp.eq.s32.totalorder %v1929, %v174
      %vm1968 = vcmp.eq.s32.totalorder %v1932, %v174
      %vm1969 = vcmp.eq.s32.totalorder %v1935, %v174
      %vm1970 = vcmp.eq.s32.totalorder %v1938, %v174
      %vm1971 = vcmp.eq.s32.totalorder %v1941, %v174
      %vm1972 = vcmp.eq.s32.totalorder %v1944, %v174
      %vm1973 = vcmp.eq.s32.totalorder %v1947, %v174
      %vm1974 = vcmp.eq.s32.totalorder %v1950, %v174
      %v1975 = vsel %vm1951, 1.0, 0.0
      %v1976 = vsel %vm1952, 1.0, 0.0
      %v1977 = vsel %vm1953, 1.0, 0.0
      %v1978 = vsel %vm1954, 1.0, 0.0
      %v1979 = vsel %vm1955, 1.0, 0.0
      %v1980 = vsel %vm1956, 1.0, 0.0
      %v1981 = vsel %vm1957, 1.0, 0.0
      %v1982 = vsel %vm1958, 1.0, 0.0
      %v1983 = vsel %vm1959, 1.0, 0.0
      %v1984 = vsel %vm1960, 1.0, 0.0
      %v1985 = vsel %vm1961, 1.0, 0.0
      %v1986 = vsel %vm1962, 1.0, 0.0
      %v1987 = vsel %vm1963, 1.0, 0.0
      %v1988 = vsel %vm1964, 1.0, 0.0
      %v1989 = vsel %vm1965, 1.0, 0.0
      %v1990 = vsel %vm1966, 1.0, 0.0
      %v1991 = vsel %vm1967, 1.0, 0.0
      %v1992 = vsel %vm1968, 1.0, 0.0
      %v1993 = vsel %vm1969, 1.0, 0.0
      %v1994 = vsel %vm1970, 1.0, 0.0
      %v1995 = vsel %vm1971, 1.0, 0.0
      %v1996 = vsel %vm1972, 1.0, 0.0
      %v1997 = vsel %vm1973, 1.0, 0.0
      %v1998 = vsel %vm1974, 1.0, 0.0
      %1999 = vset.pattern.permute.xlu0 13
      %2000 = vperm.xlu0 %1999, %v149
      %v2001 = vpop.permute.xlu0 %2000
      %2002 = vset.pattern.permute.xlu0 13
      %2003 = vperm.xlu0 %2002, %v150
      %v2004 = vpop.permute.xlu0 %2003
      %2005 = vset.pattern.permute.xlu0 13
      %2006 = vperm.xlu0 %2005, %v151
      %v2007 = vpop.permute.xlu0 %2006
      %2008 = vset.pattern.permute.xlu0 13
      %2009 = vperm.xlu0 %2008, %v152
      %v2010 = vpop.permute.xlu0 %2009
      %2011 = vset.pattern.permute.xlu0 13
      %2012 = vperm.xlu0 %2011, %v153
      %v2013 = vpop.permute.xlu0 %2012
      %2014 = vset.pattern.permute.xlu0 13
      %2015 = vperm.xlu0 %2014, %v154
      %v2016 = vpop.permute.xlu0 %2015
      %2017 = vset.pattern.permute.xlu0 13
      %2018 = vperm.xlu0 %2017, %v155
      %v2019 = vpop.permute.xlu0 %2018
      %2020 = vset.pattern.permute.xlu0 13
      %2021 = vperm.xlu0 %2020, %v156
      %v2022 = vpop.permute.xlu0 %2021
      %2023 = vset.pattern.permute.xlu0 13
      %2024 = vperm.xlu0 %2023, %v157
      %v2025 = vpop.permute.xlu0 %2024
      %2026 = vset.pattern.permute.xlu0 13
      %2027 = vperm.xlu0 %2026, %v158
      %v2028 = vpop.permute.xlu0 %2027
      %2029 = vset.pattern.permute.xlu0 13
      %2030 = vperm.xlu0 %2029, %v159
      %v2031 = vpop.permute.xlu0 %2030
      %2032 = vset.pattern.permute.xlu0 13
      %2033 = vperm.xlu0 %2032, %v160
      %v2034 = vpop.permute.xlu0 %2033
      %2035 = vset.pattern.permute.xlu0 13
      %2036 = vperm.xlu0 %2035, %v161
      %v2037 = vpop.permute.xlu0 %2036
      %2038 = vset.pattern.permute.xlu0 13
      %2039 = vperm.xlu0 %2038, %v162
      %v2040 = vpop.permute.xlu0 %2039
      %2041 = vset.pattern.permute.xlu0 13
      %2042 = vperm.xlu0 %2041, %v163
      %v2043 = vpop.permute.xlu0 %2042
      %2044 = vset.pattern.permute.xlu0 13
      %2045 = vperm.xlu0 %2044, %v164
      %v2046 = vpop.permute.xlu0 %2045
      %2047 = vset.pattern.permute.xlu0 13
      %2048 = vperm.xlu0 %2047, %v165
      %v2049 = vpop.permute.xlu0 %2048
      %2050 = vset.pattern.permute.xlu0 13
      %2051 = vperm.xlu0 %2050, %v166
      %v2052 = vpop.permute.xlu0 %2051
      %2053 = vset.pattern.permute.xlu0 13
      %2054 = vperm.xlu0 %2053, %v167
      %v2055 = vpop.permute.xlu0 %2054
      %2056 = vset.pattern.permute.xlu0 13
      %2057 = vperm.xlu0 %2056, %v168
      %v2058 = vpop.permute.xlu0 %2057
      %2059 = vset.pattern.permute.xlu0 13
      %2060 = vperm.xlu0 %2059, %v169
      %v2061 = vpop.permute.xlu0 %2060
      %2062 = vset.pattern.permute.xlu0 13
      %2063 = vperm.xlu0 %2062, %v170
      %v2064 = vpop.permute.xlu0 %2063
      %2065 = vset.pattern.permute.xlu0 13
      %2066 = vperm.xlu0 %2065, %v171
      %v2067 = vpop.permute.xlu0 %2066
      %2068 = vset.pattern.permute.xlu0 13
      %2069 = vperm.xlu0 %2068, %v172
      %v2070 = vpop.permute.xlu0 %2069
      %vm2071 = vcmp.eq.s32.totalorder %v2001, %v174
      %vm2072 = vcmp.eq.s32.totalorder %v2004, %v174
      %vm2073 = vcmp.eq.s32.totalorder %v2007, %v174
      %vm2074 = vcmp.eq.s32.totalorder %v2010, %v174
      %vm2075 = vcmp.eq.s32.totalorder %v2013, %v174
      %vm2076 = vcmp.eq.s32.totalorder %v2016, %v174
      %vm2077 = vcmp.eq.s32.totalorder %v2019, %v174
      %vm2078 = vcmp.eq.s32.totalorder %v2022, %v174
      %vm2079 = vcmp.eq.s32.totalorder %v2025, %v174
      %vm2080 = vcmp.eq.s32.totalorder %v2028, %v174
      %vm2081 = vcmp.eq.s32.totalorder %v2031, %v174
      %vm2082 = vcmp.eq.s32.totalorder %v2034, %v174
      %vm2083 = vcmp.eq.s32.totalorder %v2037, %v174
      %vm2084 = vcmp.eq.s32.totalorder %v2040, %v174
      %vm2085 = vcmp.eq.s32.totalorder %v2043, %v174
      %vm2086 = vcmp.eq.s32.totalorder %v2046, %v174
      %vm2087 = vcmp.eq.s32.totalorder %v2049, %v174
      %vm2088 = vcmp.eq.s32.totalorder %v2052, %v174
      %vm2089 = vcmp.eq.s32.totalorder %v2055, %v174
      %vm2090 = vcmp.eq.s32.totalorder %v2058, %v174
      %vm2091 = vcmp.eq.s32.totalorder %v2061, %v174
      %vm2092 = vcmp.eq.s32.totalorder %v2064, %v174
      %vm2093 = vcmp.eq.s32.totalorder %v2067, %v174
      %vm2094 = vcmp.eq.s32.totalorder %v2070, %v174
      %v2095 = vsel %vm2071, 1.0, 0.0
      %v2096 = vsel %vm2072, 1.0, 0.0
      %v2097 = vsel %vm2073, 1.0, 0.0
      %v2098 = vsel %vm2074, 1.0, 0.0
      %v2099 = vsel %vm2075, 1.0, 0.0
      %v2100 = vsel %vm2076, 1.0, 0.0
      %v2101 = vsel %vm2077, 1.0, 0.0
      %v2102 = vsel %vm2078, 1.0, 0.0
      %v2103 = vsel %vm2079, 1.0, 0.0
      %v2104 = vsel %vm2080, 1.0, 0.0
      %v2105 = vsel %vm2081, 1.0, 0.0
      %v2106 = vsel %vm2082, 1.0, 0.0
      %v2107 = vsel %vm2083, 1.0, 0.0
      %v2108 = vsel %vm2084, 1.0, 0.0
      %v2109 = vsel %vm2085, 1.0, 0.0
      %v2110 = vsel %vm2086, 1.0, 0.0
      %v2111 = vsel %vm2087, 1.0, 0.0
      %v2112 = vsel %vm2088, 1.0, 0.0
      %v2113 = vsel %vm2089, 1.0, 0.0
      %v2114 = vsel %vm2090, 1.0, 0.0
      %v2115 = vsel %vm2091, 1.0, 0.0
      %v2116 = vsel %vm2092, 1.0, 0.0
      %v2117 = vsel %vm2093, 1.0, 0.0
      %v2118 = vsel %vm2094, 1.0, 0.0
      %v2119 = vadd.f32 %v1975, %v2095
      %v2120 = vadd.f32 %v1976, %v2096
      %v2121 = vadd.f32 %v1977, %v2097
      %v2122 = vadd.f32 %v1978, %v2098
      %v2123 = vadd.f32 %v1979, %v2099
      %v2124 = vadd.f32 %v1980, %v2100
      %v2125 = vadd.f32 %v1981, %v2101
      %v2126 = vadd.f32 %v1982, %v2102
      %v2127 = vadd.f32 %v1983, %v2103
      %v2128 = vadd.f32 %v1984, %v2104
      %v2129 = vadd.f32 %v1985, %v2105
      %v2130 = vadd.f32 %v1986, %v2106
      %v2131 = vadd.f32 %v1987, %v2107
      %v2132 = vadd.f32 %v1988, %v2108
      %v2133 = vadd.f32 %v1989, %v2109
      %v2134 = vadd.f32 %v1990, %v2110
      %v2135 = vadd.f32 %v1991, %v2111
      %v2136 = vadd.f32 %v1992, %v2112
      %v2137 = vadd.f32 %v1993, %v2113
      %v2138 = vadd.f32 %v1994, %v2114
      %v2139 = vadd.f32 %v1995, %v2115
      %v2140 = vadd.f32 %v1996, %v2116
      %v2141 = vadd.f32 %v1997, %v2117
      %v2142 = vadd.f32 %v1998, %v2118
      %v2143 = vld [vmem:[%s1] sm:$0xff]
      %v2144 = vld [vmem:[%s1 + $0x8] sm:$0xff]
      %v2145 = vld [vmem:[%s1 + $0x10] sm:$0xff]
      %v2146 = vld [vmem:[%s1 + $0x18] sm:$0xff]
      %v2147 = vld [vmem:[%s1 + $0x20] sm:$0xff]
      %v2148 = vld [vmem:[%s1 + $0x28] sm:$0xff]
      %v2149 = vld [vmem:[%s1 + $0x30] sm:$0xff]
      %v2150 = vld [vmem:[%s1 + $0x38] sm:$0xff]
      %v2151 = vld [vmem:[%s1 + $0x40] sm:$0xff]
      %v2152 = vld [vmem:[%s1 + $0x48] sm:$0xff]
      %v2153 = vld [vmem:[%s1 + $0x50] sm:$0xff]
      %v2154 = vld [vmem:[%s1 + $0x58] sm:$0xff]
      %v2155 = vld [vmem:[%s1 + $0x60] sm:$0xff]
      %v2156 = vld [vmem:[%s1 + $0x68] sm:$0xff]
      %v2157 = vld [vmem:[%s1 + $0x70] sm:$0xff]
      %v2158 = vld [vmem:[%s1 + $0x78] sm:$0xff]
      %v2159 = vld [vmem:[%s1 + $0x80] sm:$0xff]
      %v2160 = vld [vmem:[%s1 + $0x88] sm:$0xff]
      %v2161 = vld [vmem:[%s1 + $0x90] sm:$0xff]
      %v2162 = vld [vmem:[%s1 + $0x98] sm:$0xff]
      %v2163 = vld [vmem:[%s1 + $0xa0] sm:$0xff]
      %v2164 = vld [vmem:[%s1 + $0xa8] sm:$0xff]
      %v2165 = vld [vmem:[%s1 + $0xb0] sm:$0xff]
      %v2166 = vld [vmem:[%s1 + $0xb8] sm:$0xff]
      %v2167 = vld [vmem:[%s1 + $0xc0] sm:$0xff]
      %v2168 = vld [vmem:[%s1 + $0xc8] sm:$0xff]
      %v2169 = vld [vmem:[%s1 + $0xd0] sm:$0xff]
      %v2170 = vld [vmem:[%s1 + $0xd8] sm:$0xff]
      %v2171 = vld [vmem:[%s1 + $0xe0] sm:$0xff]
      %v2172 = vld [vmem:[%s1 + $0xe8] sm:$0xff]
      %v2173 = vld [vmem:[%s1 + $0xf0] sm:$0xff]
      %v2174 = vld [vmem:[%s1 + $0xf8] sm:$0xff]
      %v2175 = vld [vmem:[%s1 + $0x100] sm:$0xff]
      %v2176 = vld [vmem:[%s1 + $0x108] sm:$0xff]
      %v2177 = vld [vmem:[%s1 + $0x110] sm:$0xff]
      %v2178 = vld [vmem:[%s1 + $0x118] sm:$0xff]
      %v2179 = vld [vmem:[%s1 + $0x120] sm:$0xff]
      %v2180 = vld [vmem:[%s1 + $0x128] sm:$0xff]
      %v2181 = vld [vmem:[%s1 + $0x130] sm:$0xff]
      %v2182 = vld [vmem:[%s1 + $0x138] sm:$0xff]
      %v2183 = vld [vmem:[%s1 + $0x140] sm:$0xff]
      %v2184 = vld [vmem:[%s1 + $0x148] sm:$0xff]
      %v2185 = vld [vmem:[%s1 + $0x150] sm:$0xff]
      %v2186 = vld [vmem:[%s1 + $0x158] sm:$0xff]
      %v2187 = vld [vmem:[%s1 + $0x160] sm:$0xff]
      %v2188 = vld [vmem:[%s1 + $0x168] sm:$0xff]
      %v2189 = vld [vmem:[%s1 + $0x170] sm:$0xff]
      %v2190 = vld [vmem:[%s1 + $0x178] sm:$0xff]
      %v2191 = vld [vmem:[%s1 + $0x180] sm:$0xff]
      %v2192 = vld [vmem:[%s1 + $0x188] sm:$0xff]
      %v2193 = vld [vmem:[%s1 + $0x190] sm:$0xff]
      %v2194 = vld [vmem:[%s1 + $0x198] sm:$0xff]
      %v2195 = vld [vmem:[%s1 + $0x1a0] sm:$0xff]
      %v2196 = vld [vmem:[%s1 + $0x1a8] sm:$0xff]
      %v2197 = vld [vmem:[%s1 + $0x1b0] sm:$0xff]
      %v2198 = vld [vmem:[%s1 + $0x1b8] sm:$0xff]
      %v2199 = vld [vmem:[%s1 + $0x1c0] sm:$0xff]
      %v2200 = vld [vmem:[%s1 + $0x1c8] sm:$0xff]
      %v2201 = vld [vmem:[%s1 + $0x1d0] sm:$0xff]
      %v2202 = vld [vmem:[%s1 + $0x1d8] sm:$0xff]
      %v2203 = vld [vmem:[%s1 + $0x1e0] sm:$0xff]
      %v2204 = vld [vmem:[%s1 + $0x1e8] sm:$0xff]
      %v2205 = vld [vmem:[%s1 + $0x1f0] sm:$0xff]
      %v2206 = vld [vmem:[%s1 + $0x1f8] sm:$0xff]
      %v2207 = vld [vmem:[%s1 + $0x200] sm:$0xff]
      %v2208 = vld [vmem:[%s1 + $0x208] sm:$0xff]
      %v2209 = vld [vmem:[%s1 + $0x210] sm:$0xff]
      %v2210 = vld [vmem:[%s1 + $0x218] sm:$0xff]
      %v2211 = vld [vmem:[%s1 + $0x220] sm:$0xff]
      %v2212 = vld [vmem:[%s1 + $0x228] sm:$0xff]
      %v2213 = vld [vmem:[%s1 + $0x230] sm:$0xff]
      %v2214 = vld [vmem:[%s1 + $0x238] sm:$0xff]
      %v2215 = vld [vmem:[%s1 + $0x240] sm:$0xff]
      %v2216 = vld [vmem:[%s1 + $0x248] sm:$0xff]
      %v2217 = vld [vmem:[%s1 + $0x250] sm:$0xff]
      %v2218 = vld [vmem:[%s1 + $0x258] sm:$0xff]
      %v2219 = vld [vmem:[%s1 + $0x260] sm:$0xff]
      %v2220 = vld [vmem:[%s1 + $0x268] sm:$0xff]
      %v2221 = vld [vmem:[%s1 + $0x270] sm:$0xff]
      %v2222 = vld [vmem:[%s1 + $0x278] sm:$0xff]
      %v2223 = vld [vmem:[%s1 + $0x280] sm:$0xff]
      %v2224 = vld [vmem:[%s1 + $0x288] sm:$0xff]
      %v2225 = vld [vmem:[%s1 + $0x290] sm:$0xff]
      %v2226 = vld [vmem:[%s1 + $0x298] sm:$0xff]
      %v2227 = vld [vmem:[%s1 + $0x2a0] sm:$0xff]
      %v2228 = vld [vmem:[%s1 + $0x2a8] sm:$0xff]
      %v2229 = vld [vmem:[%s1 + $0x2b0] sm:$0xff]
      %v2230 = vld [vmem:[%s1 + $0x2b8] sm:$0xff]
      %v2231 = vld [vmem:[%s1 + $0x2c0] sm:$0xff]
      %v2232 = vld [vmem:[%s1 + $0x2c8] sm:$0xff]
      %v2233 = vld [vmem:[%s1 + $0x2d0] sm:$0xff]
      %v2234 = vld [vmem:[%s1 + $0x2d8] sm:$0xff]
      %v2235 = vld [vmem:[%s1 + $0x2e0] sm:$0xff]
      %v2236 = vld [vmem:[%s1 + $0x2e8] sm:$0xff]
      %v2237 = vld [vmem:[%s1 + $0x2f0] sm:$0xff]
      %v2238 = vld [vmem:[%s1 + $0x2f8] sm:$0xff]
      %v2239 = vld [vmem:[%s1 + $0x300] sm:$0xff]
      %v2240 = vld [vmem:[%s1 + $0x308] sm:$0xff]
      %v2241 = vld [vmem:[%s1 + $0x310] sm:$0xff]
      %v2242 = vld [vmem:[%s1 + $0x318] sm:$0xff]
      %v2243 = vld [vmem:[%s1 + $0x320] sm:$0xff]
      %v2244 = vld [vmem:[%s1 + $0x328] sm:$0xff]
      %v2245 = vld [vmem:[%s1 + $0x330] sm:$0xff]
      %v2246 = vld [vmem:[%s1 + $0x338] sm:$0xff]
      %v2247 = vld [vmem:[%s1 + $0x340] sm:$0xff]
      %v2248 = vld [vmem:[%s1 + $0x348] sm:$0xff]
      %v2249 = vld [vmem:[%s1 + $0x350] sm:$0xff]
      %v2250 = vld [vmem:[%s1 + $0x358] sm:$0xff]
      %v2251 = vld [vmem:[%s1 + $0x360] sm:$0xff]
      %v2252 = vld [vmem:[%s1 + $0x368] sm:$0xff]
      %v2253 = vld [vmem:[%s1 + $0x370] sm:$0xff]
      %v2254 = vld [vmem:[%s1 + $0x378] sm:$0xff]
      %v2255 = vld [vmem:[%s1 + $0x380] sm:$0xff]
      %v2256 = vld [vmem:[%s1 + $0x388] sm:$0xff]
      %v2257 = vld [vmem:[%s1 + $0x390] sm:$0xff]
      %v2258 = vld [vmem:[%s1 + $0x398] sm:$0xff]
      %v2259 = vld [vmem:[%s1 + $0x3a0] sm:$0xff]
      %v2260 = vld [vmem:[%s1 + $0x3a8] sm:$0xff]
      %v2261 = vld [vmem:[%s1 + $0x3b0] sm:$0xff]
      %v2262 = vld [vmem:[%s1 + $0x3b8] sm:$0xff]
      %v2263 = vld [vmem:[%s1 + $0x3c0] sm:$0xff]
      %v2264 = vld [vmem:[%s1 + $0x3c8] sm:$0xff]
      %v2265 = vld [vmem:[%s1 + $0x3d0] sm:$0xff]
      %v2266 = vld [vmem:[%s1 + $0x3d8] sm:$0xff]
      %v2267 = vld [vmem:[%s1 + $0x3e0] sm:$0xff]
      %v2268 = vld [vmem:[%s1 + $0x3e8] sm:$0xff]
      %v2269 = vld [vmem:[%s1 + $0x3f0] sm:$0xff]
      %v2270 = vld [vmem:[%s1 + $0x3f8] sm:$0xff]
      %2271 = vmatprep.subr.mxu0 %v2144
      %2272 = vmatpush1.msra.mxu0 %v2143
      %2273 = vmatprep.subr.mxu0 %v2148
      %2274 = vmatpush1.msra.mxu0 %v2147
      %2275 = vmatprep.subr.mxu0 %v2152
      %2276 = vmatpush1.msra.mxu0 %v2151
      %2277 = vmatprep.subr.mxu0 %v2156
      %2278 = vmatpush1.msra.mxu0 %v2155
      %2279 = vmatprep.subr.mxu0 %v2160
      %2280 = vmatpush1.msra.mxu0 %v2159
      %2281 = vmatprep.subr.mxu0 %v2164
      %2282 = vmatpush1.msra.mxu0 %v2163
      %2283 = vmatprep.subr.mxu0 %v2168
      %2284 = vmatpush1.msra.mxu0 %v2167
      %2285 = vmatprep.subr.mxu0 %v2172
      %2286 = vmatpush1.msra.mxu0 %v2171
      %2287 = vmatprep.subr.mxu0 %v2176
      %2288 = vmatpush1.msra.mxu0 %v2175
      %2289 = vmatprep.subr.mxu0 %v2180
      %2290 = vmatpush1.msra.mxu0 %v2179
      %2291 = vmatprep.subr.mxu0 %v2184
      %2292 = vmatpush1.msra.mxu0 %v2183
      %2293 = vmatprep.subr.mxu0 %v2188
      %2294 = vmatpush1.msra.mxu0 %v2187
      %2295 = vmatprep.subr.mxu0 %v2192
      %2296 = vmatpush1.msra.mxu0 %v2191
      %2297 = vmatprep.subr.mxu0 %v2196
      %2298 = vmatpush1.msra.mxu0 %v2195
      %2299 = vmatprep.subr.mxu0 %v2200
      %2300 = vmatpush1.msra.mxu0 %v2199
      %2301 = vmatprep.subr.mxu0 %v2204
      %2302 = vmatpush1.msra.mxu0 %v2203
      %2303 = vmatprep.subr.mxu0 %v2208
      %2304 = vmatpush1.msra.mxu0 %v2207
      %2305 = vmatprep.subr.mxu0 %v2212
      %2306 = vmatpush1.msra.mxu0 %v2211
      %2307 = vmatprep.subr.mxu0 %v2216
      %2308 = vmatpush1.msra.mxu0 %v2215
      %2309 = vmatprep.subr.mxu0 %v2220
      %2310 = vmatpush1.msra.mxu0 %v2219
      %2311 = vmatprep.subr.mxu0 %v2224
      %2312 = vmatpush1.msra.mxu0 %v2223
      %2313 = vmatprep.subr.mxu0 %v2228
      %2314 = vmatpush1.msra.mxu0 %v2227
      %2315 = vmatprep.subr.mxu0 %v2232
      %2316 = vmatpush1.msra.mxu0 %v2231
      %2317 = vmatprep.subr.mxu0 %v2236
      %2318 = vmatpush1.msra.mxu0 %v2235
      %2319 = vmatprep.subr.mxu0 %v2240
      %2320 = vmatpush1.msra.mxu0 %v2239
      %2321 = vmatprep.subr.mxu0 %v2244
      %2322 = vmatpush1.msra.mxu0 %v2243
      %2323 = vmatprep.subr.mxu0 %v2248
      %2324 = vmatpush1.msra.mxu0 %v2247
      %2325 = vmatprep.subr.mxu0 %v2252
      %2326 = vmatpush1.msra.mxu0 %v2251
      %2327 = vmatprep.subr.mxu0 %v2256
      %2328 = vmatpush1.msra.mxu0 %v2255
      %2329 = vmatprep.subr.mxu0 %v2260
      %2330 = vmatpush1.msra.mxu0 %v2259
      %2331 = vmatprep.subr.mxu0 %v2264
      %2332 = vmatpush1.msra.mxu0 %v2263
      %2333 = vmatprep.subr.mxu0 %v2268
      %2334 = vmatpush1.msra.mxu0 %v2267
      %2335 = vmatprep.mubr.f32.mxu0 %v2119
      %2336 = vmatmul.mubr.f32.gmra.mrb[0].mxu0 %v1855
      %v2337 = vpop.f32.mrb[0].mxu0
      %v2338 = vadd.f32 0.0, %v2337
      %v2339 = vpop.f32.mrb[0].mxu0
      %v2340 = vadd.f32 0.0, %v2339
      %2341 = vmatprep.mubr.f32.mxu0 %v2120
      %2342 = vmatmul.mubr.f32.gmra.mrb[0].mxu0 %v1856
      %v2343 = vpop.f32.mrb[0].mxu0
      %v2344 = vadd.f32 0.0, %v2343
      %v2345 = vpop.f32.mrb[0].mxu0
      %v2346 = vadd.f32 0.0, %v2345
      %2347 = vmatprep.mubr.f32.mxu0 %v2121
      %2348 = vmatmul.mubr.f32.gmra.mrb[0].mxu0 %v1857
      %v2349 = vpop.f32.mrb[0].mxu0
      %v2350 = vadd.f32 0.0, %v2349
      %v2351 = vpop.f32.mrb[0].mxu0
      %v2352 = vadd.f32 0.0, %v2351
      %2353 = vmatprep.mubr.f32.mxu0 %v2122
      %2354 = vmatmul.mubr.f32.gmra.mrb[0].mxu0 %v1858
      %v2355 = vpop.f32.mrb[0].mxu0
      %v2356 = vadd.f32 0.0, %v2355
      %v2357 = vpop.f32.mrb[0].mxu0
      %v2358 = vadd.f32 0.0, %v2357
      %2359 = vmatprep.mubr.f32.mxu0 %v2123
      %2360 = vmatmul.mubr.f32.gmra.mrb[0].mxu0 %v1859
      %v2361 = vpop.f32.mrb[0].mxu0
      %v2362 = vadd.f32 0.0, %v2361
      %v2363 = vpop.f32.mrb[0].mxu0
      %v2364 = vadd.f32 0.0, %v2363
      %2365 = vmatprep.mubr.f32.mxu0 %v2124
      %2366 = vmatmul.mubr.f32.gmra.mrb[0].mxu0 %v1860
      %v2367 = vpop.f32.mrb[0].mxu0
      %v2368 = vadd.f32 0.0, %v2367
      %v2369 = vpop.f32.mrb[0].mxu0
      %v2370 = vadd.f32 0.0, %v2369
      %2371 = vmatprep.mubr.f32.mxu0 %v2125
      %2372 = vmatmul.mubr.f32.gmra.mrb[0].mxu0 %v1861
      %v2373 = vpop.f32.mrb[0].mxu0
      %v2374 = vadd.f32 0.0, %v2373
      %v2375 = vpop.f32.mrb[0].mxu0
      %v2376 = vadd.f32 0.0, %v2375
      %2377 = vmatprep.mubr.f32.mxu0 %v2126
      %2378 = vmatmul.mubr.f32.gmra.mrb[0].mxu0 %v1862
      %v2379 = vpop.f32.mrb[0].mxu0
      %v2380 = vadd.f32 0.0, %v2379
      %v2381 = vpop.f32.mrb[0].mxu0
      %v2382 = vadd.f32 0.0, %v2381
      %2383 = vmatprep.mubr.f32.mxu0 %v2127
      %2384 = vmatmul.mubr.f32.gmra.mrb[0].mxu0 %v1863
      %v2385 = vpop.f32.mrb[0].mxu0
      %v2386 = vadd.f32 0.0, %v2385
      %v2387 = vpop.f32.mrb[0].mxu0
      %v2388 = vadd.f32 0.0, %v2387
      %2389 = vmatprep.mubr.f32.mxu0 %v2128
      %2390 = vmatmul.mubr.f32.gmra.mrb[0].mxu0 %v1864
      %v2391 = vpop.f32.mrb[0].mxu0
      %v2392 = vadd.f32 0.0, %v2391
      %v2393 = vpop.f32.mrb[0].mxu0
      %v2394 = vadd.f32 0.0, %v2393
      %2395 = vmatprep.mubr.f32.mxu0 %v2129
      %2396 = vmatmul.mubr.f32.gmra.mrb[0].mxu0 %v1865
      %v2397 = vpop.f32.mrb[0].mxu0
      %v2398 = vadd.f32 0.0, %v2397
      %v2399 = vpop.f32.mrb[0].mxu0
      %v2400 = vadd.f32 0.0, %v2399
      %2401 = vmatprep.mubr.f32.mxu0 %v2130
      %2402 = vmatmul.mubr.f32.gmra.mrb[0].mxu0 %v1866
      %v2403 = vpop.f32.mrb[0].mxu0
      %v2404 = vadd.f32 0.0, %v2403
      %v2405 = vpop.f32.mrb[0].mxu0
      %v2406 = vadd.f32 0.0, %v2405
      %2407 = vmatprep.mubr.f32.mxu0 %v2131
      %2408 = vmatmul.mubr.f32.gmra.mrb[0].mxu0 %v1867
      %v2409 = vpop.f32.mrb[0].mxu0
      %v2410 = vadd.f32 0.0, %v2409
      %v2411 = vpop.f32.mrb[0].mxu0
      %v2412 = vadd.f32 0.0, %v2411
      %2413 = vmatprep.mubr.f32.mxu0 %v2132
      %2414 = vmatmul.mubr.f32.gmra.mrb[0].mxu0 %v1868
      %v2415 = vpop.f32.mrb[0].mxu0
      %v2416 = vadd.f32 0.0, %v2415
      %v2417 = vpop.f32.mrb[0].mxu0
      %v2418 = vadd.f32 0.0, %v2417
      %2419 = vmatprep.mubr.f32.mxu0 %v2133
      %2420 = vmatmul.mubr.f32.gmra.mrb[0].mxu0 %v1869
      %v2421 = vpop.f32.mrb[0].mxu0
      %v2422 = vadd.f32 0.0, %v2421
      %v2423 = vpop.f32.mrb[0].mxu0
      %v2424 = vadd.f32 0.0, %v2423
      %2425 = vmatprep.mubr.f32.mxu0 %v2134
      %2426 = vmatmul.mubr.f32.gmra.mrb[0].mxu0 %v1870
      %v2427 = vpop.f32.mrb[0].mxu0
      %v2428 = vadd.f32 0.0, %v2427
      %v2429 = vpop.f32.mrb[0].mxu0
      %v2430 = vadd.f32 0.0, %v2429
      %2431 = vmatprep.mubr.f32.mxu0 %v2135
      %2432 = vmatmul.mubr.f32.gmra.mrb[0].mxu0 %v1871
      %v2433 = vpop.f32.mrb[0].mxu0
      %v2434 = vadd.f32 0.0, %v2433
      %v2435 = vpop.f32.mrb[0].mxu0
      %v2436 = vadd.f32 0.0, %v2435
      %2437 = vmatprep.mubr.f32.mxu0 %v2136
      %2438 = vmatmul.mubr.f32.gmra.mrb[0].mxu0 %v1872
      %v2439 = vpop.f32.mrb[0].mxu0
      %v2440 = vadd.f32 0.0, %v2439
      %v2441 = vpop.f32.mrb[0].mxu0
      %v2442 = vadd.f32 0.0, %v2441
      %2443 = vmatprep.mubr.f32.mxu0 %v2137
      %2444 = vmatmul.mubr.f32.gmra.mrb[0].mxu0 %v1873
      %v2445 = vpop.f32.mrb[0].mxu0
      %v2446 = vadd.f32 0.0, %v2445
      %v2447 = vpop.f32.mrb[0].mxu0
      %v2448 = vadd.f32 0.0, %v2447
      %2449 = vmatprep.mubr.f32.mxu0 %v2138
      %2450 = vmatmul.mubr.f32.gmra.mrb[0].mxu0 %v1874
      %v2451 = vpop.f32.mrb[0].mxu0
      %v2452 = vadd.f32 0.0, %v2451
      %v2453 = vpop.f32.mrb[0].mxu0
      %v2454 = vadd.f32 0.0, %v2453
      %2455 = vmatprep.mubr.f32.mxu0 %v2139
      %2456 = vmatmul.mubr.f32.gmra.mrb[0].mxu0 %v1875
      %v2457 = vpop.f32.mrb[0].mxu0
      %v2458 = vadd.f32 0.0, %v2457
      %v2459 = vpop.f32.mrb[0].mxu0
      %v2460 = vadd.f32 0.0, %v2459
      %2461 = vmatprep.mubr.f32.mxu0 %v2140
      %2462 = vmatmul.mubr.f32.gmra.mrb[0].mxu0 %v1876
      %v2463 = vpop.f32.mrb[0].mxu0
      %v2464 = vadd.f32 0.0, %v2463
      %v2465 = vpop.f32.mrb[0].mxu0
      %v2466 = vadd.f32 0.0, %v2465
      %2467 = vmatprep.mubr.f32.mxu0 %v2141
      %2468 = vmatmul.mubr.f32.gmra.mrb[0].mxu0 %v1877
      %v2469 = vpop.f32.mrb[0].mxu0
      %v2470 = vadd.f32 0.0, %v2469
      %v2471 = vpop.f32.mrb[0].mxu0
      %v2472 = vadd.f32 0.0, %v2471
      %2473 = vmatprep.mubr.f32.mxu0 %v2142
      %2474 = vmatmul.mubr.f32.gmra.mrb[0].mxu0 %v1878
      %v2475 = vpop.f32.mrb[0].mxu0
      %v2476 = vadd.f32 0.0, %v2475
      %v2477 = vpop.f32.mrb[0].mxu0
      %v2478 = vadd.f32 0.0, %v2477
      %2479 = vdwg.mxu0
      %2480 = vmatprep.subr.mxu0 %v2146
      %2481 = vmatpush1.msra.mxu0 %v2145
      %2482 = vmatprep.subr.mxu0 %v2150
      %2483 = vmatpush1.msra.mxu0 %v2149
      %2484 = vmatprep.subr.mxu0 %v2154
      %2485 = vmatpush1.msra.mxu0 %v2153
      %2486 = vmatprep.subr.mxu0 %v2158
      %2487 = vmatpush1.msra.mxu0 %v2157
      %2488 = vmatprep.subr.mxu0 %v2162
      %2489 = vmatpush1.msra.mxu0 %v2161
      %2490 = vmatprep.subr.mxu0 %v2166
      %2491 = vmatpush1.msra.mxu0 %v2165
      %2492 = vmatprep.subr.mxu0 %v2170
      %2493 = vmatpush1.msra.mxu0 %v2169
      %2494 = vmatprep.subr.mxu0 %v2174
      %2495 = vmatpush1.msra.mxu0 %v2173
      %2496 = vmatprep.subr.mxu0 %v2178
      %2497 = vmatpush1.msra.mxu0 %v2177
      %2498 = vmatprep.subr.mxu0 %v2182
      %2499 = vmatpush1.msra.mxu0 %v2181
      %2500 = vmatprep.subr.mxu0 %v2186
      %2501 = vmatpush1.msra.mxu0 %v2185
      %2502 = vmatprep.subr.mxu0 %v2190
      %2503 = vmatpush1.msra.mxu0 %v2189
      %2504 = vmatprep.subr.mxu0 %v2194
      %2505 = vmatpush1.msra.mxu0 %v2193
      %2506 = vmatprep.subr.mxu0 %v2198
      %2507 = vmatpush1.msra.mxu0 %v2197
      %2508 = vmatprep.subr.mxu0 %v2202
      %2509 = vmatpush1.msra.mxu0 %v2201
      %2510 = vmatprep.subr.mxu0 %v2206
      %2511 = vmatpush1.msra.mxu0 %v2205
      %2512 = vmatprep.subr.mxu0 %v2210
      %2513 = vmatpush1.msra.mxu0 %v2209
      %2514 = vmatprep.subr.mxu0 %v2214
      %2515 = vmatpush1.msra.mxu0 %v2213
      %2516 = vmatprep.subr.mxu0 %v2218
      %2517 = vmatpush1.msra.mxu0 %v2217
      %2518 = vmatprep.subr.mxu0 %v2222
      %2519 = vmatpush1.msra.mxu0 %v2221
      %2520 = vmatprep.subr.mxu0 %v2226
      %2521 = vmatpush1.msra.mxu0 %v2225
      %2522 = vmatprep.subr.mxu0 %v2230
      %2523 = vmatpush1.msra.mxu0 %v2229
      %2524 = vmatprep.subr.mxu0 %v2234
      %2525 = vmatpush1.msra.mxu0 %v2233
      %2526 = vmatprep.subr.mxu0 %v2238
      %2527 = vmatpush1.msra.mxu0 %v2237
      %2528 = vmatprep.subr.mxu0 %v2242
      %2529 = vmatpush1.msra.mxu0 %v2241
      %2530 = vmatprep.subr.mxu0 %v2246
      %2531 = vmatpush1.msra.mxu0 %v2245
      %2532 = vmatprep.subr.mxu0 %v2250
      %2533 = vmatpush1.msra.mxu0 %v2249
      %2534 = vmatprep.subr.mxu0 %v2254
      %2535 = vmatpush1.msra.mxu0 %v2253
      %2536 = vmatprep.subr.mxu0 %v2258
      %2537 = vmatpush1.msra.mxu0 %v2257
      %2538 = vmatprep.subr.mxu0 %v2262
      %2539 = vmatpush1.msra.mxu0 %v2261
      %2540 = vmatprep.subr.mxu0 %v2266
      %2541 = vmatpush1.msra.mxu0 %v2265
      %2542 = vmatprep.subr.mxu0 %v2270
      %2543 = vmatpush1.msra.mxu0 %v2269
      %2544 = vmatprep.mubr.f32.mxu0 %v2119
      %2545 = vmatmul.mubr.f32.gmra.mrb[0].mxu0 %v1855
      %v2546 = vpop.f32.mrb[0].mxu0
      %v2547 = vadd.f32 0.0, %v2546
      %v2548 = vpop.f32.mrb[0].mxu0
      %v2549 = vadd.f32 0.0, %v2548
      %2550 = vmatprep.mubr.f32.mxu0 %v2120
      %2551 = vmatmul.mubr.f32.gmra.mrb[0].mxu0 %v1856
      %v2552 = vpop.f32.mrb[0].mxu0
      %v2553 = vadd.f32 0.0, %v2552
      %v2554 = vpop.f32.mrb[0].mxu0
      %v2555 = vadd.f32 0.0, %v2554
      %2556 = vmatprep.mubr.f32.mxu0 %v2121
      %2557 = vmatmul.mubr.f32.gmra.mrb[0].mxu0 %v1857
      %v2558 = vpop.f32.mrb[0].mxu0
      %v2559 = vadd.f32 0.0, %v2558
      %v2560 = vpop.f32.mrb[0].mxu0
      %v2561 = vadd.f32 0.0, %v2560
      %2562 = vmatprep.mubr.f32.mxu0 %v2122
      %2563 = vmatmul.mubr.f32.gmra.mrb[0].mxu0 %v1858
      %v2564 = vpop.f32.mrb[0].mxu0
      %v2565 = vadd.f32 0.0, %v2564
      %v2566 = vpop.f32.mrb[0].mxu0
      %v2567 = vadd.f32 0.0, %v2566
      %2568 = vmatprep.mubr.f32.mxu0 %v2123
      %2569 = vmatmul.mubr.f32.gmra.mrb[0].mxu0 %v1859
      %v2570 = vpop.f32.mrb[0].mxu0
      %v2571 = vadd.f32 0.0, %v2570
      %v2572 = vpop.f32.mrb[0].mxu0
      %v2573 = vadd.f32 0.0, %v2572
      %2574 = vmatprep.mubr.f32.mxu0 %v2124
      %2575 = vmatmul.mubr.f32.gmra.mrb[0].mxu0 %v1860
      %v2576 = vpop.f32.mrb[0].mxu0
      %v2577 = vadd.f32 0.0, %v2576
      %v2578 = vpop.f32.mrb[0].mxu0
      %v2579 = vadd.f32 0.0, %v2578
      %2580 = vmatprep.mubr.f32.mxu0 %v2125
      %2581 = vmatmul.mubr.f32.gmra.mrb[0].mxu0 %v1861
      %v2582 = vpop.f32.mrb[0].mxu0
      %v2583 = vadd.f32 0.0, %v2582
      %v2584 = vpop.f32.mrb[0].mxu0
      %v2585 = vadd.f32 0.0, %v2584
      %2586 = vmatprep.mubr.f32.mxu0 %v2126
      %2587 = vmatmul.mubr.f32.gmra.mrb[0].mxu0 %v1862
      %v2588 = vpop.f32.mrb[0].mxu0
      %v2589 = vadd.f32 0.0, %v2588
      %v2590 = vpop.f32.mrb[0].mxu0
      %v2591 = vadd.f32 0.0, %v2590
      %2592 = vmatprep.mubr.f32.mxu0 %v2127
      %2593 = vmatmul.mubr.f32.gmra.mrb[0].mxu0 %v1863
      %v2594 = vpop.f32.mrb[0].mxu0
      %v2595 = vadd.f32 0.0, %v2594
      %v2596 = vpop.f32.mrb[0].mxu0
      %v2597 = vadd.f32 0.0, %v2596
      %2598 = vmatprep.mubr.f32.mxu0 %v2128
      %2599 = vmatmul.mubr.f32.gmra.mrb[0].mxu0 %v1864
      %v2600 = vpop.f32.mrb[0].mxu0
      %v2601 = vadd.f32 0.0, %v2600
      %v2602 = vpop.f32.mrb[0].mxu0
      %v2603 = vadd.f32 0.0, %v2602
      %2604 = vmatprep.mubr.f32.mxu0 %v2129
      %2605 = vmatmul.mubr.f32.gmra.mrb[0].mxu0 %v1865
      %v2606 = vpop.f32.mrb[0].mxu0
      %v2607 = vadd.f32 0.0, %v2606
      %v2608 = vpop.f32.mrb[0].mxu0
      %v2609 = vadd.f32 0.0, %v2608
      %2610 = vmatprep.mubr.f32.mxu0 %v2130
      %2611 = vmatmul.mubr.f32.gmra.mrb[0].mxu0 %v1866
      %v2612 = vpop.f32.mrb[0].mxu0
      %v2613 = vadd.f32 0.0, %v2612
      %v2614 = vpop.f32.mrb[0].mxu0
      %v2615 = vadd.f32 0.0, %v2614
      %2616 = vmatprep.mubr.f32.mxu0 %v2131
      %2617 = vmatmul.mubr.f32.gmra.mrb[0].mxu0 %v1867
      %v2618 = vpop.f32.mrb[0].mxu0
      %v2619 = vadd.f32 0.0, %v2618
      %v2620 = vpop.f32.mrb[0].mxu0
      %v2621 = vadd.f32 0.0, %v2620
      %2622 = vmatprep.mubr.f32.mxu0 %v2132
      %2623 = vmatmul.mubr.f32.gmra.mrb[0].mxu0 %v1868
      %v2624 = vpop.f32.mrb[0].mxu0
      %v2625 = vadd.f32 0.0, %v2624
      %v2626 = vpop.f32.mrb[0].mxu0
      %v2627 = vadd.f32 0.0, %v2626
      %2628 = vmatprep.mubr.f32.mxu0 %v2133
      %2629 = vmatmul.mubr.f32.gmra.mrb[0].mxu0 %v1869
      %v2630 = vpop.f32.mrb[0].mxu0
      %v2631 = vadd.f32 0.0, %v2630
      %v2632 = vpop.f32.mrb[0].mxu0
      %v2633 = vadd.f32 0.0, %v2632
      %2634 = vmatprep.mubr.f32.mxu0 %v2134
      %2635 = vmatmul.mubr.f32.gmra.mrb[0].mxu0 %v1870
      %v2636 = vpop.f32.mrb[0].mxu0
      %v2637 = vadd.f32 0.0, %v2636
      %v2638 = vpop.f32.mrb[0].mxu0
      %v2639 = vadd.f32 0.0, %v2638
      %2640 = vmatprep.mubr.f32.mxu0 %v2135
      %2641 = vmatmul.mubr.f32.gmra.mrb[0].mxu0 %v1871
      %v2642 = vpop.f32.mrb[0].mxu0
      %v2643 = vadd.f32 0.0, %v2642
      %v2644 = vpop.f32.mrb[0].mxu0
      %v2645 = vadd.f32 0.0, %v2644
      %2646 = vmatprep.mubr.f32.mxu0 %v2136
      %2647 = vmatmul.mubr.f32.gmra.mrb[0].mxu0 %v1872
      %v2648 = vpop.f32.mrb[0].mxu0
      %v2649 = vadd.f32 0.0, %v2648
      %v2650 = vpop.f32.mrb[0].mxu0
      %v2651 = vadd.f32 0.0, %v2650
      %2652 = vmatprep.mubr.f32.mxu0 %v2137
      %2653 = vmatmul.mubr.f32.gmra.mrb[0].mxu0 %v1873
      %v2654 = vpop.f32.mrb[0].mxu0
      %v2655 = vadd.f32 0.0, %v2654
      %v2656 = vpop.f32.mrb[0].mxu0
      %v2657 = vadd.f32 0.0, %v2656
      %2658 = vmatprep.mubr.f32.mxu0 %v2138
      %2659 = vmatmul.mubr.f32.gmra.mrb[0].mxu0 %v1874
      %v2660 = vpop.f32.mrb[0].mxu0
      %v2661 = vadd.f32 0.0, %v2660
      %v2662 = vpop.f32.mrb[0].mxu0
      %v2663 = vadd.f32 0.0, %v2662
      %2664 = vmatprep.mubr.f32.mxu0 %v2139
      %2665 = vmatmul.mubr.f32.gmra.mrb[0].mxu0 %v1875
      %v2666 = vpop.f32.mrb[0].mxu0
      %v2667 = vadd.f32 0.0, %v2666
      %v2668 = vpop.f32.mrb[0].mxu0
      %v2669 = vadd.f32 0.0, %v2668
      %2670 = vmatprep.mubr.f32.mxu0 %v2140
      %2671 = vmatmul.mubr.f32.gmra.mrb[0].mxu0 %v1876
      %v2672 = vpop.f32.mrb[0].mxu0
      %v2673 = vadd.f32 0.0, %v2672
      %v2674 = vpop.f32.mrb[0].mxu0
      %v2675 = vadd.f32 0.0, %v2674
      %2676 = vmatprep.mubr.f32.mxu0 %v2141
      %2677 = vmatmul.mubr.f32.gmra.mrb[0].mxu0 %v1877
      %v2678 = vpop.f32.mrb[0].mxu0
      %v2679 = vadd.f32 0.0, %v2678
      %v2680 = vpop.f32.mrb[0].mxu0
      %v2681 = vadd.f32 0.0, %v2680
      %2682 = vmatprep.mubr.f32.mxu0 %v2142
      %2683 = vmatmul.mubr.f32.gmra.mrb[0].mxu0 %v1878
      %v2684 = vpop.f32.mrb[0].mxu0
      %v2685 = vadd.f32 0.0, %v2684
      %v2686 = vpop.f32.mrb[0].mxu0
      %v2687 = vadd.f32 0.0, %v2686
      %2688 = vdwg.mxu0
      %2689 = vst [vmem:[%s147] sm:$0xff] %v2338
      %2690 = vst [vmem:[%s147 + $0x8] sm:$0xff] %v2340
      %2691 = vst [vmem:[%s147 + $0x10] sm:$0xff] %v2547
      %2692 = vst [vmem:[%s147 + $0x18] sm:$0xff] %v2549
      %2693 = vst [vmem:[%s147 + $0x20] sm:$0xff] %v2344
      %2694 = vst [vmem:[%s147 + $0x28] sm:$0xff] %v2346
      %2695 = vst [vmem:[%s147 + $0x30] sm:$0xff] %v2553
      %2696 = vst [vmem:[%s147 + $0x38] sm:$0xff] %v2555
      %2697 = vst [vmem:[%s147 + $0x40] sm:$0xff] %v2350
      %2698 = vst [vmem:[%s147 + $0x48] sm:$0xff] %v2352
      %2699 = vst [vmem:[%s147 + $0x50] sm:$0xff] %v2559
      %2700 = vst [vmem:[%s147 + $0x58] sm:$0xff] %v2561
      %2701 = vst [vmem:[%s147 + $0x60] sm:$0xff] %v2356
      %2702 = vst [vmem:[%s147 + $0x68] sm:$0xff] %v2358
      %2703 = vst [vmem:[%s147 + $0x70] sm:$0xff] %v2565
      %2704 = vst [vmem:[%s147 + $0x78] sm:$0xff] %v2567
      %2705 = vst [vmem:[%s147 + $0x80] sm:$0xff] %v2362
      %2706 = vst [vmem:[%s147 + $0x88] sm:$0xff] %v2364
      %2707 = vst [vmem:[%s147 + $0x90] sm:$0xff] %v2571
      %2708 = vst [vmem:[%s147 + $0x98] sm:$0xff] %v2573
      %2709 = vst [vmem:[%s147 + $0xa0] sm:$0xff] %v2368
      %2710 = vst [vmem:[%s147 + $0xa8] sm:$0xff] %v2370
      %2711 = vst [vmem:[%s147 + $0xb0] sm:$0xff] %v2577
      %2712 = vst [vmem:[%s147 + $0xb8] sm:$0xff] %v2579
      %2713 = vst [vmem:[%s147 + $0xc0] sm:$0xff] %v2374
      %2714 = vst [vmem:[%s147 + $0xc8] sm:$0xff] %v2376
      %2715 = vst [vmem:[%s147 + $0xd0] sm:$0xff] %v2583
      %2716 = vst [vmem:[%s147 + $0xd8] sm:$0xff] %v2585
      %2717 = vst [vmem:[%s147 + $0xe0] sm:$0xff] %v2380
      %2718 = vst [vmem:[%s147 + $0xe8] sm:$0xff] %v2382
      %2719 = vst [vmem:[%s147 + $0xf0] sm:$0xff] %v2589
      %2720 = vst [vmem:[%s147 + $0xf8] sm:$0xff] %v2591
      %2721 = vst [vmem:[%s147 + $0x100] sm:$0xff] %v2386
      %2722 = vst [vmem:[%s147 + $0x108] sm:$0xff] %v2388
      %2723 = vst [vmem:[%s147 + $0x110] sm:$0xff] %v2595
      %2724 = vst [vmem:[%s147 + $0x118] sm:$0xff] %v2597
      %2725 = vst [vmem:[%s147 + $0x120] sm:$0xff] %v2392
      %2726 = vst [vmem:[%s147 + $0x128] sm:$0xff] %v2394
      %2727 = vst [vmem:[%s147 + $0x130] sm:$0xff] %v2601
      %2728 = vst [vmem:[%s147 + $0x138] sm:$0xff] %v2603
      %2729 = vst [vmem:[%s147 + $0x140] sm:$0xff] %v2398
      %2730 = vst [vmem:[%s147 + $0x148] sm:$0xff] %v2400
      %2731 = vst [vmem:[%s147 + $0x150] sm:$0xff] %v2607
      %2732 = vst [vmem:[%s147 + $0x158] sm:$0xff] %v2609
      %2733 = vst [vmem:[%s147 + $0x160] sm:$0xff] %v2404
      %2734 = vst [vmem:[%s147 + $0x168] sm:$0xff] %v2406
      %2735 = vst [vmem:[%s147 + $0x170] sm:$0xff] %v2613
      %2736 = vst [vmem:[%s147 + $0x178] sm:$0xff] %v2615
      %2737 = vst [vmem:[%s147 + $0x180] sm:$0xff] %v2410
      %2738 = vst [vmem:[%s147 + $0x188] sm:$0xff] %v2412
      %2739 = vst [vmem:[%s147 + $0x190] sm:$0xff] %v2619
      %2740 = vst [vmem:[%s147 + $0x198] sm:$0xff] %v2621
      %2741 = vst [vmem:[%s147 + $0x1a0] sm:$0xff] %v2416
      %2742 = vst [vmem:[%s147 + $0x1a8] sm:$0xff] %v2418
      %2743 = vst [vmem:[%s147 + $0x1b0] sm:$0xff] %v2625
      %2744 = vst [vmem:[%s147 + $0x1b8] sm:$0xff] %v2627
      %2745 = vst [vmem:[%s147 + $0x1c0] sm:$0xff] %v2422
      %2746 = vst [vmem:[%s147 + $0x1c8] sm:$0xff] %v2424
      %2747 = vst [vmem:[%s147 + $0x1d0] sm:$0xff] %v2631
      %2748 = vst [vmem:[%s147 + $0x1d8] sm:$0xff] %v2633
      %2749 = vst [vmem:[%s147 + $0x1e0] sm:$0xff] %v2428
      %2750 = vst [vmem:[%s147 + $0x1e8] sm:$0xff] %v2430
      %2751 = vst [vmem:[%s147 + $0x1f0] sm:$0xff] %v2637
      %2752 = vst [vmem:[%s147 + $0x1f8] sm:$0xff] %v2639
      %2753 = vst [vmem:[%s147 + $0x200] sm:$0xff] %v2434
      %2754 = vst [vmem:[%s147 + $0x208] sm:$0xff] %v2436
      %2755 = vst [vmem:[%s147 + $0x210] sm:$0xff] %v2643
      %2756 = vst [vmem:[%s147 + $0x218] sm:$0xff] %v2645
      %2757 = vst [vmem:[%s147 + $0x220] sm:$0xff] %v2440
      %2758 = vst [vmem:[%s147 + $0x228] sm:$0xff] %v2442
      %2759 = vst [vmem:[%s147 + $0x230] sm:$0xff] %v2649
      %2760 = vst [vmem:[%s147 + $0x238] sm:$0xff] %v2651
      %2761 = vst [vmem:[%s147 + $0x240] sm:$0xff] %v2446
      %2762 = vst [vmem:[%s147 + $0x248] sm:$0xff] %v2448
      %2763 = vst [vmem:[%s147 + $0x250] sm:$0xff] %v2655
      %2764 = vst [vmem:[%s147 + $0x258] sm:$0xff] %v2657
      %2765 = vst [vmem:[%s147 + $0x260] sm:$0xff] %v2452
      %2766 = vst [vmem:[%s147 + $0x268] sm:$0xff] %v2454
      %2767 = vst [vmem:[%s147 + $0x270] sm:$0xff] %v2661
      %2768 = vst [vmem:[%s147 + $0x278] sm:$0xff] %v2663
      %2769 = vst [vmem:[%s147 + $0x280] sm:$0xff] %v2458
      %2770 = vst [vmem:[%s147 + $0x288] sm:$0xff] %v2460
      %2771 = vst [vmem:[%s147 + $0x290] sm:$0xff] %v2667
      %2772 = vst [vmem:[%s147 + $0x298] sm:$0xff] %v2669
      %2773 = vst [vmem:[%s147 + $0x2a0] sm:$0xff] %v2464
      %2774 = vst [vmem:[%s147 + $0x2a8] sm:$0xff] %v2466
      %2775 = vst [vmem:[%s147 + $0x2b0] sm:$0xff] %v2673
      %2776 = vst [vmem:[%s147 + $0x2b8] sm:$0xff] %v2675
      %2777 = vst [vmem:[%s147 + $0x2c0] sm:$0xff] %v2470
      %2778 = vst [vmem:[%s147 + $0x2c8] sm:$0xff] %v2472
      %2779 = vst [vmem:[%s147 + $0x2d0] sm:$0xff] %v2679
      %2780 = vst [vmem:[%s147 + $0x2d8] sm:$0xff] %v2681
      %2781 = vst [vmem:[%s147 + $0x2e0] sm:$0xff] %v2476
      %2782 = vst [vmem:[%s147 + $0x2e8] sm:$0xff] %v2478
      %2783 = vst [vmem:[%s147 + $0x2f0] sm:$0xff] %v2685
      %2784 = vst [vmem:[%s147 + $0x2f8] sm:$0xff] %v2687
      %s2785 = smul.u32 24, %s13
      %p2786 = scmp.lt.s32.totalorder %s2785, 47
      %s2787 = scalar_select %p2786, %s2785, 47
      %s2788 = smul.addr %s2787, 4
      %s2789 = smul.addr %s2788, 8
      %s2790 = scalar_lea.vmem %s2, %s2789
      // Predicated region
      $region29: #{dtqn_token_embedding.1} parent=27 // pred_check
        %p2791 = pneg %p78
      $region30: #{dtqn_token_embedding.1} parent=27 // pred_check_branch
        %2793 = sbr.rel (%p2791) target = $region32
      $region31: #{dtqn_token_embedding.1} parent=27 // pred_region
        %s2794 = smul.u32 24, %s13
      $region32: #{dtqn_token_embedding.1} parent=27 // pred_fallthru
        _
    $region28: #{dtqn_token_embedding.1} parent=5 // pred_fallthru
      _
    %p2795 = scmp.le.s32.totalorder 2, %s8
    // Predicated region
    $region33: #{dtqn_token_embedding.1} parent=5 // pred_check
      %p2796 = pneg %p2795
    $region34: #{dtqn_token_embedding.1} parent=5 // pred_check_branch
      %2798 = sbr.rel (%p2796) target = $region36
    $region35: #{dtqn_token_embedding.1} parent=5 // pred_region
      %s2799 = ssub.s32 %s8, 2
      // Predicated region
      $region37: #{dtqn_token_embedding.1} parent=35 // pred_check
        %p2800 = pneg %p84
      $region38: #{dtqn_token_embedding.1} parent=35 // pred_check_branch
        %2802 = sbr.rel (%p2800) target = $region40
      $region39: #{dtqn_token_embedding.1} parent=35 // pred_region
        %s2803 = smul.u32 24, %s14
        %p2804 = scmp.lt.s32.totalorder %s2803, 47
        %s2805 = scalar_select %p2804, %s2803, 47
        %s2806 = smul.addr %s2805, 4
        %s2807 = smul.addr %s2806, 8
        %s2808 = scalar_lea.vmem %s2, %s2807
      $region40: #{dtqn_token_embedding.1} parent=35 // pred_fallthru
        _
    $region36: #{dtqn_token_embedding.1} parent=5 // pred_fallthru
      _
  $region6: #{dtqn_token_embedding.1} parent=0 // loop_footer
    %s12 = sadd.s32 1, %s8
  $region7: #{dtqn_token_embedding.1} parent=0 // loop_footer_branch
    %7 = sbr.rel target = $region3
  $region8: #{dtqn_token_embedding.1} parent=0 // loop_exit
    _

</llo_original>
